<compile_context>
chip_gen: v5e
topology: v5e:2x2
jax: 0.10.0
libtpu: 0.0.40
codegen_flags: <defaults>
</compile_context>

<pallas_src>
import jax
import jax.numpy as jnp
from jax.experimental import pallas as pl
from jax.experimental.pallas import tpu as pltpu

INPUT_DIM = 4
GATE_H1 = 128
GATE_H2 = 256
GATE_H3 = 128
NUM_EXPERTS = 3
EXPERT_HIDDEN = 32
OUTPUT_DIM = 3
LEAKY_SLOPE = 0.01  # PyTorch nn.LeakyReLU default

FUSED_L1_ROWS = GATE_H1 + NUM_EXPERTS * EXPERT_HIDDEN   # 224: gating-h1 + 3 expert hiddens
HEAD_COLS = GATE_H3 + NUM_EXPERTS * EXPERT_HIDDEN       # 224: gating-h3 + 3 expert hiddens
HEAD_ROWS = NUM_EXPERTS + NUM_EXPERTS * OUTPUT_DIM      # 12 : 3 gate logits + 3x3 expert logits


# ----------------------------- kernel helpers -------------------------------

def _softmax_rows(rows):
    """Softmax across a short static list of (1, TB) rows.

    Fully unrolled (VPU maxes/adds, no XLU cross-lane reductions); the
    reciprocal goes to the otherwise-idle EUP slot.
    """
    m = rows[0]
    for r in rows[1:]:
        m = jnp.maximum(m, r)
    exps = [jnp.exp(r - m) for r in rows]
    denom = exps[0]
    for e in exps[1:]:
        denom = denom + e
    inv = pl.reciprocal(denom, approx=True)
    return [e * inv for e in exps]


# --------------------------------- kernel -----------------------------------

def moe_kernel(x_ref,
               w1_ref, b1_ref,              # fused first layers (224,4)/(224,1)
               gw2_ref, gb2_ref,            # (256,128) bf16 / (256,1) f32
               gw3_ref, gb3_ref,            # (128,256) bf16 / (128,1) f32
               wh_ref, bh_ref,              # fused heads (12,224)/(12,1) f32
               o_ref):
    x = x_ref[...]                                        # (INPUT_DIM, TB), batch on lanes

    # ---- fused first layers (gating + 3 experts), K=4 -> VPU broadcast-MACs.
    # Systolic MXU would be <4% utilized at K=4, so keep this on the VPU.
    h1 = b1_ref[...] + w1_ref[:, 0:1] * x[0:1, :]
    for k in range(1, INPUT_DIM):
        h1 = h1 + w1_ref[:, k:k + 1] * x[k:k + 1, :]
    h1 = jnp.maximum(h1, 0.0)                             # one ReLU for all 4 sub-nets
    hg = h1[:GATE_H1, :]                                  # (128, TB) gating hidden
    he = h1[GATE_H1:, :]                                  # ( 96, TB) 3 expert hiddens

    # ---- gating trunk: bf16 operands on the MXU, f32 accumulation.
    h2 = jnp.dot(gw2_ref[...], hg.astype(jnp.bfloat16),
                 preferred_element_type=jnp.float32) + gb2_ref[...]   # (256, TB)
    h2 = jnp.where(h2 > 0, h2, LEAKY_SLOPE * h2)                      # LeakyReLU (f32 VPU)
    h3 = jnp.dot(gw3_ref[...], h2.astype(jnp.bfloat16),
                 preferred_element_type=jnp.float32) + gb3_ref[...]   # (128, TB)
    h3 = jnp.where(h3 > 0, h3, LEAKY_SLOPE * h3)

    # ---- fused heads: one (12,224)x(224,TB) dot replaces 4 tiny M=3 matmuls.
    head_in = jnp.concatenate([h3, he], axis=0)                       # (224, TB)
    logits = jnp.dot(wh_ref[...], head_in,
                     preferred_element_type=jnp.float32) + bh_ref[...]  # (12, TB)

    # Rows 0..2  : gating logits  -> softmax over experts.
    # Rows 3+3e..: expert e logits -> softmax over output classes.
    gate = _softmax_rows([logits[e:e + 1, :] for e in range(NUM_EXPERTS)])

    out_rows = [None] * OUTPUT_DIM
    for e in range(NUM_EXPERTS):
        base = NUM_EXPERTS + e * OUTPUT_DIM
        pe = _softmax_rows([logits[base + c:base + c + 1, :] for c in range(OUTPUT_DIM)])
        g = gate[e]
        for c in range(OUTPUT_DIM):
            t = pe[c] * g
            out_rows[c] = t if out_rows[c] is None else out_rows[c] + t

    # Single lane-dense store of the whole (OUTPUT_DIM, TB) tile.
    o_ref[...] = jnp.concatenate(out_rows, axis=0).astype(o_ref.dtype)


# --------------------------------- wrapper ----------------------------------

def _resident(arr):
    """Whole-array BlockSpec with a constant index_map -> stays in VMEM across grid steps."""
    nd = arr.ndim
    return pl.BlockSpec(arr.shape, lambda i: (0,) * nd)


def _pack_params(gating_params, expert_params):
    """Host-side weight packing: fused first layers, bf16 trunk, block-diag heads."""
    gw1, gb1, gw2, gb2, gw3, gb3, gw4, gb4 = gating_params
    ew1, eb1, ew2, eb2 = expert_params

    # Fused first layers: [gw1; ew1_0; ew1_1; ew1_2] -> (224, 4)
    w1_fused = jnp.concatenate([gw1] + [ew1[e] for e in range(NUM_EXPERTS)], axis=0)
    b1_fused = jnp.concatenate([gb1] + [eb1[e] for e in range(NUM_EXPERTS)], axis=0)

    # Big gating matmuls: bf16 operands (f32 biases kept for exact add).
    gw2_b = gw2.astype(jnp.bfloat16)
    gw3_b = gw3.astype(jnp.bfloat16)

    # Fused heads: (12, 224) block matrix = [gw4 | blockdiag(ew2_0..2)].
    w_head = jnp.zeros((HEAD_ROWS, HEAD_COLS), jnp.float32)
    w_head = w_head.at[:NUM_EXPERTS, :GATE_H3].set(gw4)
    for e in range(NUM_EXPERTS):
        r0 = NUM_EXPERTS + e * OUTPUT_DIM
        c0 = GATE_H3 + e * EXPERT_HIDDEN
        w_head = w_head.at[r0:r0 + OUTPUT_DIM, c0:c0 + EXPERT_HIDDEN].set(ew2[e])
    b_head = jnp.concatenate([gb4] + [eb2[e] for e in range(NUM_EXPERTS)], axis=0)

    return w1_fused, b1_fused, gw2_b, gb2, gw3_b, gb3, w_head, b_head


def moe_forward(x, gating_params, expert_params, *, block_b=2048):
    """x: (batch, INPUT_DIM) -> (batch, OUTPUT_DIM). block_b must be a multiple of 128."""
    batch, in_dim = x.shape
    assert in_dim == INPUT_DIM
    assert block_b % 128 == 0

    packed = _pack_params(gating_params, expert_params)
    w1f, b1f, gw2b, gb2, gw3b, gb3, w_head, b_head = packed

    # Clamp the tile so tiny batches don't over-pad, then pad batch to a tile multiple.
    lane_min = ((batch + 127) // 128) * 128
    block_b = min(block_b, lane_min)
    padded = pl.cdiv(batch, block_b) * block_b
    x_t = jnp.pad(x.T, ((0, 0), (0, padded - batch)))       # (INPUT_DIM, padded), batch on lanes

    grid = (padded // block_b,)
    in_specs = [
        pl.BlockSpec((INPUT_DIM, block_b), lambda i: (0, i)),
        _resident(w1f), _resident(b1f),
        _resident(gw2b), _resident(gb2),
        _resident(gw3b), _resident(gb3),
        _resident(w_head), _resident(b_head),
    ]
    out_specs = pl.BlockSpec((OUTPUT_DIM, block_b), lambda i: (0, i))

    # VMEM budget from actual live intermediates: ~(224+256+128+224+bf16 casts+
    # misc) f32 words per batch column  ->  ~6 KiB/col generous bound, plus
    # resident weights and double-buffered I/O.  Capped below v7x's 64 MiB.
    vmem_limit = int(6 * 1024 * block_b + (4 << 20))
    vmem_limit = max(16 << 20, min(vmem_limit, 60 << 20))

    out_t = pl.pallas_call(
        moe_kernel,
        grid=grid,
        in_specs=in_specs,
        out_specs=out_specs,
        out_shape=jax.ShapeDtypeStruct((OUTPUT_DIM, padded), jnp.float32),
        compiler_params=pltpu.CompilerParams(
            # TODO(synk): on v7x, pltpu.CORE_PARALLEL over this axis would split the
            # batch tiles across both TensorCores; kept "parallel" for portability.
            dimension_semantics=("parallel",),
            vmem_limit_bytes=vmem_limit,
        ),
    )(x_t, w1f, b1f, gw2b, gb2, gw3b, gb3, w_head, b_head)

    return out_t[:, :batch].T                                # back to (batch, OUTPUT_DIM)


# ------------------------------ params & reference --------------------------

def _linear_params(key, in_f, out_f):
    # Mimic PyTorch nn.Linear default init: U(-1/sqrt(fan_in), 1/sqrt(fan_in)).
    kw, kb = jax.random.split(key)
    lim = 1.0 / jnp.sqrt(jnp.float32(in_f))
    w = jax.random.uniform(kw, (out_f, in_f), jnp.float32, -lim, lim)   # PyTorch (out, in) layout
    b = jax.random.uniform(kb, (out_f, 1), jnp.float32, -lim, lim)      # column -> lane broadcast
    return w, b


def init_gating_params(key):
    k1, k2, k3, k4 = jax.random.split(key, 4)
    gw1, gb1 = _linear_params(k1, INPUT_DIM, GATE_H1)
    gw2, gb2 = _linear_params(k2, GATE_H1, GATE_H2)
    gw3, gb3 = _linear_params(k3, GATE_H2, GATE_H3)
    gw4, gb4 = _linear_params(k4, GATE_H3, NUM_EXPERTS)
    return gw1, gb1, gw2, gb2, gw3, gb3, gw4, gb4


def init_expert_params(key):
    keys = jax.random.split(key, NUM_EXPERTS)
    w1s, b1s, w2s, b2s = [], [], [], []
    for e in range(NUM_EXPERTS):
        k1, k2 = jax.random.split(keys[e])
        w1, b1 = _linear_params(k1, INPUT_DIM, EXPERT_HIDDEN)
        w2, b2 = _linear_params(k2, EXPERT_HIDDEN, OUTPUT_DIM)
        w1s.append(w1); b1s.append(b1); w2s.append(w2); b2s.append(b2)
    return jnp.stack(w1s), jnp.stack(b1s), jnp.stack(w2s), jnp.stack(b2s)


def moe_reference(x, gating_params, expert_params):
    gw1, gb1, gw2, gb2, gw3, gb3, gw4, gb4 = gating_params
    ew1, eb1, ew2, eb2 = expert_params
    h = jnp.maximum(x @ gw1.T + gb1[:, 0], 0.0)
    h = h @ gw2.T + gb2[:, 0]
    h = jnp.where(h > 0, h, LEAKY_SLOPE * h)
    h = h @ gw3.T + gb3[:, 0]
    h = jnp.where(h > 0, h, LEAKY_SLOPE * h)
    gate = jax.nn.softmax(h @ gw4.T + gb4[:, 0], axis=1)                  # (B, E)
    expert_outs = []
    for e in range(NUM_EXPERTS):
        he = jnp.maximum(x @ ew1[e].T + eb1[e, :, 0], 0.0)
        expert_outs.append(jax.nn.softmax(he @ ew2[e].T + eb2[e, :, 0], axis=1))
    outs = jnp.stack(expert_outs, axis=2)                                  # (B, OUT, E)
    return jnp.sum(outs * gate[:, None, :], axis=2)                        # (B, OUT)


# ---------------------------------- main -------------------------------------

if __name__ == "__main__":
    key = jax.random.PRNGKey(0)
    kx, kg, ke, kx2 = jax.random.split(key, 4)

    gating_params = init_gating_params(kg)
    expert_params = init_expert_params(ke)

    # Small demo batch (single grid step; block_b auto-clamped to 128 lanes).
    batch = 8
    x = jax.random.normal(kx, (batch, INPUT_DIM), jnp.float32)
    out = moe_forward(x, gating_params, expert_params)
    jax.block_until_ready(out)
    ref = moe_reference(x, gating_params, expert_params)
    assert out.shape == (batch, OUTPUT_DIM)
    # bf16 MXU operands + EUP approx reciprocal -> slightly loose tolerance vs exact f32.
    assert jnp.allclose(out, ref, atol=2e-2, rtol=1e-2)
    assert jnp.allclose(jnp.sum(out, axis=1), 1.0, atol=2e-2)

    # Second check exercising a multi-step batch grid (pipelined tiles, resident weights).
    batch2 = 300
    x2 = jax.random.normal(kx2, (batch2, INPUT_DIM), jnp.float32)
    out2 = moe_forward(x2, gating_params, expert_params, block_b=128)
    jax.block_until_ready(out2)
    ref2 = moe_reference(x2, gating_params, expert_params)
    assert out2.shape == (batch2, OUTPUT_DIM)
    assert jnp.allclose(out2, ref2, atol=2e-2, rtol=1e-2)

    print("KERNEL_OK")
</pallas_src>

<mosaic_0001>
module attributes {stable_mosaic.version = 11 : i64} {
  func.func @moe_kernel(%arg0: i32, %arg1: memref<4x128xf32, #tpu.memory_space<vmem>>, %arg2: memref<224x4xf32, #tpu.memory_space<vmem>>, %arg3: memref<224x1xf32, #tpu.memory_space<vmem>>, %arg4: memref<256x128xbf16, #tpu.memory_space<vmem>>, %arg5: memref<256x1xf32, #tpu.memory_space<vmem>>, %arg6: memref<128x256xbf16, #tpu.memory_space<vmem>>, %arg7: memref<128x1xf32, #tpu.memory_space<vmem>>, %arg8: memref<12x224xf32, #tpu.memory_space<vmem>>, %arg9: memref<12x1xf32, #tpu.memory_space<vmem>>, %arg10: memref<3x128xf32, #tpu.memory_space<vmem>>) attributes {dimension_semantics = [#tpu.dimension_semantics<parallel>], iteration_bounds = array<i64: 1>, scalar_prefetch = 0 : i64, scratch_operands = 0 : i64, tpu.core_type = #tpu.core_type<tc>, window_params = [{transform_indices = @transform_0, window_bounds = array<i64: 4, 128>}, {pipeline_mode = #tpu.pipeline_mode<synchronous>, transform_indices = @transform_1, window_bounds = array<i64: 224, 4>}, {pipeline_mode = #tpu.pipeline_mode<synchronous>, transform_indices = @transform_2, window_bounds = array<i64: 224, 1>}, {pipeline_mode = #tpu.pipeline_mode<synchronous>, transform_indices = @transform_3, window_bounds = array<i64: 256, 128>}, {pipeline_mode = #tpu.pipeline_mode<synchronous>, transform_indices = @transform_4, window_bounds = array<i64: 256, 1>}, {pipeline_mode = #tpu.pipeline_mode<synchronous>, transform_indices = @transform_5, window_bounds = array<i64: 128, 256>}, {pipeline_mode = #tpu.pipeline_mode<synchronous>, transform_indices = @transform_6, window_bounds = array<i64: 128, 1>}, {pipeline_mode = #tpu.pipeline_mode<synchronous>, transform_indices = @transform_7, window_bounds = array<i64: 12, 224>}, {pipeline_mode = #tpu.pipeline_mode<synchronous>, transform_indices = @transform_8, window_bounds = array<i64: 12, 1>}, {transform_indices = @transform_9, window_bounds = array<i64: 3, 128>}]} {
    %c0 = arith.constant 0 : index
    %c0_0 = arith.constant 0 : index
    %0 = vector.load %arg1[%c0, %c0_0] : memref<4x128xf32, #tpu.memory_space<vmem>>, vector<4x128xf32>
    %c0_1 = arith.constant 0 : index
    %c0_2 = arith.constant 0 : index
    %1 = vector.load %arg3[%c0_1, %c0_2] : memref<224x1xf32, #tpu.memory_space<vmem>>, vector<224x1xf32>
    %c0_3 = arith.constant 0 : index
    %c0_4 = arith.constant 0 : index
    %2 = vector.load %arg2[%c0_3, %c0_4] : memref<224x4xf32, #tpu.memory_space<vmem>>, vector<224x1xf32>
    %3 = vector.extract_strided_slice %0 {offsets = [0, 0], sizes = [1, 128], strides = [1, 1]} : vector<4x128xf32> to vector<1x128xf32>
    %4 = vector.broadcast %2 : vector<224x1xf32> to vector<224x128xf32>
    %5 = vector.broadcast %3 : vector<1x128xf32> to vector<224x128xf32>
    %6 = arith.mulf %4, %5 : vector<224x128xf32>
    %7 = vector.broadcast %1 : vector<224x1xf32> to vector<224x128xf32>
    %8 = arith.addf %7, %6 : vector<224x128xf32>
    %c0_5 = arith.constant 0 : index
    %c1 = arith.constant 1 : index
    %9 = vector.load %arg2[%c0_5, %c1] : memref<224x4xf32, #tpu.memory_space<vmem>>, vector<224x1xf32>
    %10 = vector.extract_strided_slice %0 {offsets = [1, 0], sizes = [1, 128], strides = [1, 1]} : vector<4x128xf32> to vector<1x128xf32>
    %11 = vector.broadcast %9 : vector<224x1xf32> to vector<224x128xf32>
    %12 = vector.broadcast %10 : vector<1x128xf32> to vector<224x128xf32>
    %13 = arith.mulf %11, %12 : vector<224x128xf32>
    %14 = arith.addf %8, %13 : vector<224x128xf32>
    %c0_6 = arith.constant 0 : index
    %c2 = arith.constant 2 : index
    %15 = vector.load %arg2[%c0_6, %c2] : memref<224x4xf32, #tpu.memory_space<vmem>>, vector<224x1xf32>
    %16 = vector.extract_strided_slice %0 {offsets = [2, 0], sizes = [1, 128], strides = [1, 1]} : vector<4x128xf32> to vector<1x128xf32>
    %17 = vector.broadcast %15 : vector<224x1xf32> to vector<224x128xf32>
    %18 = vector.broadcast %16 : vector<1x128xf32> to vector<224x128xf32>
    %19 = arith.mulf %17, %18 : vector<224x128xf32>
    %20 = arith.addf %14, %19 : vector<224x128xf32>
    %c0_7 = arith.constant 0 : index
    %c3 = arith.constant 3 : index
    %21 = vector.load %arg2[%c0_7, %c3] : memref<224x4xf32, #tpu.memory_space<vmem>>, vector<224x1xf32>
    %22 = vector.extract_strided_slice %0 {offsets = [3, 0], sizes = [1, 128], strides = [1, 1]} : vector<4x128xf32> to vector<1x128xf32>
    %23 = vector.broadcast %21 : vector<224x1xf32> to vector<224x128xf32>
    %24 = vector.broadcast %22 : vector<1x128xf32> to vector<224x128xf32>
    %25 = arith.mulf %23, %24 : vector<224x128xf32>
    %26 = arith.addf %20, %25 : vector<224x128xf32>
    %cst = arith.constant 0.000000e+00 : f32
    %27 = vector.broadcast %cst : f32 to vector<224x128xf32>
    %28 = arith.maximumf %26, %27 : vector<224x128xf32>
    %29 = vector.extract_strided_slice %28 {offsets = [0, 0], sizes = [128, 128], strides = [1, 1]} : vector<224x128xf32> to vector<128x128xf32>
    %30 = vector.extract_strided_slice %28 {offsets = [128, 0], sizes = [96, 128], strides = [1, 1]} : vector<224x128xf32> to vector<96x128xf32>
    %c0_8 = arith.constant 0 : index
    %c0_9 = arith.constant 0 : index
    %31 = vector.load %arg4[%c0_8, %c0_9] : memref<256x128xbf16, #tpu.memory_space<vmem>>, vector<256x128xbf16>
    %32 = arith.truncf %29 : vector<128x128xf32> to vector<128x128xbf16>
    %cst_10 = arith.constant dense<0.000000e+00> : vector<256x128xf32>
    %33 = tpu.matmul %31, %32, %cst_10 {dimension_numbers = #tpu.dot_dimension_numbers<[1], [0], [0], [1], [0, 0, 1, 1], [], []>} : vector<256x128xbf16>, vector<128x128xbf16>, vector<256x128xf32> -> vector<256x128xf32>
    %c0_11 = arith.constant 0 : index
    %c0_12 = arith.constant 0 : index
    %34 = vector.load %arg5[%c0_11, %c0_12] : memref<256x1xf32, #tpu.memory_space<vmem>>, vector<256x1xf32>
    %35 = vector.broadcast %34 : vector<256x1xf32> to vector<256x128xf32>
    %36 = arith.addf %33, %35 : vector<256x128xf32>
    %cst_13 = arith.constant 0.000000e+00 : f32
    %37 = vector.broadcast %cst_13 : f32 to vector<256x128xf32>
    %38 = arith.cmpf ogt, %36, %37 : vector<256x128xf32>
    %cst_14 = arith.constant 0.00999999977 : f32
    %39 = vector.broadcast %cst_14 : f32 to vector<256x128xf32>
    %40 = arith.mulf %39, %36 : vector<256x128xf32>
    %41 = arith.select %38, %36, %40 : vector<256x128xi1>, vector<256x128xf32>
    %c0_15 = arith.constant 0 : index
    %c0_16 = arith.constant 0 : index
    %42 = vector.load %arg6[%c0_15, %c0_16] : memref<128x256xbf16, #tpu.memory_space<vmem>>, vector<128x256xbf16>
    %43 = arith.truncf %41 : vector<256x128xf32> to vector<256x128xbf16>
    %cst_17 = arith.constant dense<0.000000e+00> : vector<128x128xf32>
    %44 = tpu.matmul %42, %43, %cst_17 {dimension_numbers = #tpu.dot_dimension_numbers<[1], [0], [0], [1], [0, 0, 1, 1], [], []>} : vector<128x256xbf16>, vector<256x128xbf16>, vector<128x128xf32> -> vector<128x128xf32>
    %c0_18 = arith.constant 0 : index
    %c0_19 = arith.constant 0 : index
    %45 = vector.load %arg7[%c0_18, %c0_19] : memref<128x1xf32, #tpu.memory_space<vmem>>, vector<128x1xf32>
    %46 = vector.broadcast %45 : vector<128x1xf32> to vector<128x128xf32>
    %47 = arith.addf %44, %46 : vector<128x128xf32>
    %cst_20 = arith.constant 0.000000e+00 : f32
    %48 = vector.broadcast %cst_20 : f32 to vector<128x128xf32>
    %49 = arith.cmpf ogt, %47, %48 : vector<128x128xf32>
    %cst_21 = arith.constant 0.00999999977 : f32
    %50 = vector.broadcast %cst_21 : f32 to vector<128x128xf32>
    %51 = arith.mulf %50, %47 : vector<128x128xf32>
    %52 = arith.select %49, %47, %51 : vector<128x128xi1>, vector<128x128xf32>
    %53 = tpu.concatenate %52, %30 in 0 : vector<128x128xf32>, vector<96x128xf32> -> vector<224x128xf32>
    %c0_22 = arith.constant 0 : index
    %c0_23 = arith.constant 0 : index
    %54 = vector.load %arg8[%c0_22, %c0_23] : memref<12x224xf32, #tpu.memory_space<vmem>>, vector<12x224xf32>
    %cst_24 = arith.constant dense<0.000000e+00> : vector<12x128xf32>
    %55 = tpu.matmul %54, %53, %cst_24 {dimension_numbers = #tpu.dot_dimension_numbers<[1], [0], [0], [1], [0, 0, 1, 1], [], []>} : vector<12x224xf32>, vector<224x128xf32>, vector<12x128xf32> -> vector<12x128xf32>
    %c0_25 = arith.constant 0 : index
    %c0_26 = arith.constant 0 : index
    %56 = vector.load %arg9[%c0_25, %c0_26] : memref<12x1xf32, #tpu.memory_space<vmem>>, vector<12x1xf32>
    %57 = vector.broadcast %56 : vector<12x1xf32> to vector<12x128xf32>
    %58 = arith.addf %55, %57 : vector<12x128xf32>
    %59 = vector.extract_strided_slice %58 {offsets = [0, 0], sizes = [1, 128], strides = [1, 1]} : vector<12x128xf32> to vector<1x128xf32>
    %60 = vector.extract_strided_slice %58 {offsets = [1, 0], sizes = [1, 128], strides = [1, 1]} : vector<12x128xf32> to vector<1x128xf32>
    %61 = vector.extract_strided_slice %58 {offsets = [2, 0], sizes = [1, 128], strides = [1, 1]} : vector<12x128xf32> to vector<1x128xf32>
    %62 = arith.maximumf %59, %60 : vector<1x128xf32>
    %63 = arith.maximumf %62, %61 : vector<1x128xf32>
    %64 = arith.subf %59, %63 : vector<1x128xf32>
    %65 = math.exp %64 : vector<1x128xf32>
    %66 = arith.subf %60, %63 : vector<1x128xf32>
    %67 = math.exp %66 : vector<1x128xf32>
    %68 = arith.subf %61, %63 : vector<1x128xf32>
    %69 = math.exp %68 : vector<1x128xf32>
    %70 = arith.addf %65, %67 : vector<1x128xf32>
    %71 = arith.addf %70, %69 : vector<1x128xf32>
    %72 = tpu.reciprocal %71 {approx = true} : vector<1x128xf32> -> vector<1x128xf32>
    %73 = arith.mulf %65, %72 : vector<1x128xf32>
    %74 = arith.mulf %67, %72 : vector<1x128xf32>
    %75 = arith.mulf %69, %72 : vector<1x128xf32>
    %76 = vector.extract_strided_slice %58 {offsets = [3, 0], sizes = [1, 128], strides = [1, 1]} : vector<12x128xf32> to vector<1x128xf32>
    %77 = vector.extract_strided_slice %58 {offsets = [4, 0], sizes = [1, 128], strides = [1, 1]} : vector<12x128xf32> to vector<1x128xf32>
    %78 = vector.extract_strided_slice %58 {offsets = [5, 0], sizes = [1, 128], strides = [1, 1]} : vector<12x128xf32> to vector<1x128xf32>
    %79 = arith.maximumf %76, %77 : vector<1x128xf32>
    %80 = arith.maximumf %79, %78 : vector<1x128xf32>
    %81 = arith.subf %76, %80 : vector<1x128xf32>
    %82 = math.exp %81 : vector<1x128xf32>
    %83 = arith.subf %77, %80 : vector<1x128xf32>
    %84 = math.exp %83 : vector<1x128xf32>
    %85 = arith.subf %78, %80 : vector<1x128xf32>
    %86 = math.exp %85 : vector<1x128xf32>
    %87 = arith.addf %82, %84 : vector<1x128xf32>
    %88 = arith.addf %87, %86 : vector<1x128xf32>
    %89 = tpu.reciprocal %88 {approx = true} : vector<1x128xf32> -> vector<1x128xf32>
    %90 = arith.mulf %82, %89 : vector<1x128xf32>
    %91 = arith.mulf %84, %89 : vector<1x128xf32>
    %92 = arith.mulf %86, %89 : vector<1x128xf32>
    %93 = arith.mulf %90, %73 : vector<1x128xf32>
    %94 = arith.mulf %91, %73 : vector<1x128xf32>
    %95 = arith.mulf %92, %73 : vector<1x128xf32>
    %96 = vector.extract_strided_slice %58 {offsets = [6, 0], sizes = [1, 128], strides = [1, 1]} : vector<12x128xf32> to vector<1x128xf32>
    %97 = vector.extract_strided_slice %58 {offsets = [7, 0], sizes = [1, 128], strides = [1, 1]} : vector<12x128xf32> to vector<1x128xf32>
    %98 = vector.extract_strided_slice %58 {offsets = [8, 0], sizes = [1, 128], strides = [1, 1]} : vector<12x128xf32> to vector<1x128xf32>
    %99 = arith.maximumf %96, %97 : vector<1x128xf32>
    %100 = arith.maximumf %99, %98 : vector<1x128xf32>
    %101 = arith.subf %96, %100 : vector<1x128xf32>
    %102 = math.exp %101 : vector<1x128xf32>
    %103 = arith.subf %97, %100 : vector<1x128xf32>
    %104 = math.exp %103 : vector<1x128xf32>
    %105 = arith.subf %98, %100 : vector<1x128xf32>
    %106 = math.exp %105 : vector<1x128xf32>
    %107 = arith.addf %102, %104 : vector<1x128xf32>
    %108 = arith.addf %107, %106 : vector<1x128xf32>
    %109 = tpu.reciprocal %108 {approx = true} : vector<1x128xf32> -> vector<1x128xf32>
    %110 = arith.mulf %102, %109 : vector<1x128xf32>
    %111 = arith.mulf %104, %109 : vector<1x128xf32>
    %112 = arith.mulf %106, %109 : vector<1x128xf32>
    %113 = arith.mulf %110, %74 : vector<1x128xf32>
    %114 = arith.addf %93, %113 : vector<1x128xf32>
    %115 = arith.mulf %111, %74 : vector<1x128xf32>
    %116 = arith.addf %94, %115 : vector<1x128xf32>
    %117 = arith.mulf %112, %74 : vector<1x128xf32>
    %118 = arith.addf %95, %117 : vector<1x128xf32>
    %119 = vector.extract_strided_slice %58 {offsets = [9, 0], sizes = [1, 128], strides = [1, 1]} : vector<12x128xf32> to vector<1x128xf32>
    %120 = vector.extract_strided_slice %58 {offsets = [10, 0], sizes = [1, 128], strides = [1, 1]} : vector<12x128xf32> to vector<1x128xf32>
    %121 = vector.extract_strided_slice %58 {offsets = [11, 0], sizes = [1, 128], strides = [1, 1]} : vector<12x128xf32> to vector<1x128xf32>
    %122 = arith.maximumf %119, %120 : vector<1x128xf32>
    %123 = arith.maximumf %122, %121 : vector<1x128xf32>
    %124 = arith.subf %119, %123 : vector<1x128xf32>
    %125 = math.exp %124 : vector<1x128xf32>
    %126 = arith.subf %120, %123 : vector<1x128xf32>
    %127 = math.exp %126 : vector<1x128xf32>
    %128 = arith.subf %121, %123 : vector<1x128xf32>
    %129 = math.exp %128 : vector<1x128xf32>
    %130 = arith.addf %125, %127 : vector<1x128xf32>
    %131 = arith.addf %130, %129 : vector<1x128xf32>
    %132 = tpu.reciprocal %131 {approx = true} : vector<1x128xf32> -> vector<1x128xf32>
    %133 = arith.mulf %125, %132 : vector<1x128xf32>
    %134 = arith.mulf %127, %132 : vector<1x128xf32>
    %135 = arith.mulf %129, %132 : vector<1x128xf32>
    %136 = arith.mulf %133, %75 : vector<1x128xf32>
    %137 = arith.addf %114, %136 : vector<1x128xf32>
    %138 = arith.mulf %134, %75 : vector<1x128xf32>
    %139 = arith.addf %116, %138 : vector<1x128xf32>
    %140 = arith.mulf %135, %75 : vector<1x128xf32>
    %141 = arith.addf %118, %140 : vector<1x128xf32>
    %142 = tpu.concatenate %137, %139, %141 in 0 : vector<1x128xf32>, vector<1x128xf32>, vector<1x128xf32> -> vector<3x128xf32>
    %c0_27 = arith.constant 0 : index
    %c0_28 = arith.constant 0 : index
    %143 = vector.load %arg10[%c0_27, %c0_28] : memref<3x128xf32, #tpu.memory_space<vmem>>, vector<3x128xf32>
    tpu.vector_store %arg10[%c0_27, %c0_28], %142 {strides = array<i32>} : memref<3x128xf32, #tpu.memory_space<vmem>>, vector<3x128xf32>,
    return
  }
  func.func @transform_0(%arg0: i32) -> (i32, i32) {
    %c0_i32 = arith.constant 0 : i32
    %c0_i32_0 = arith.constant 0 : i32
    return %c0_i32, %arg0 : i32, i32
  }
  func.func @transform_1(%arg0: i32) -> (i32, i32) {
    %c0_i32 = arith.constant 0 : i32
    %c0_i32_0 = arith.constant 0 : i32
    %c0_i32_1 = arith.constant 0 : i32
    return %c0_i32, %c0_i32_0 : i32, i32
  }
  func.func @transform_2(%arg0: i32) -> (i32, i32) {
    %c0_i32 = arith.constant 0 : i32
    %c0_i32_0 = arith.constant 0 : i32
    %c0_i32_1 = arith.constant 0 : i32
    return %c0_i32, %c0_i32_0 : i32, i32
  }
  func.func @transform_3(%arg0: i32) -> (i32, i32) {
    %c0_i32 = arith.constant 0 : i32
    %c0_i32_0 = arith.constant 0 : i32
    %c0_i32_1 = arith.constant 0 : i32
    return %c0_i32, %c0_i32_0 : i32, i32
  }
  func.func @transform_4(%arg0: i32) -> (i32, i32) {
    %c0_i32 = arith.constant 0 : i32
    %c0_i32_0 = arith.constant 0 : i32
    %c0_i32_1 = arith.constant 0 : i32
    return %c0_i32, %c0_i32_0 : i32, i32
  }
  func.func @transform_5(%arg0: i32) -> (i32, i32) {
    %c0_i32 = arith.constant 0 : i32
    %c0_i32_0 = arith.constant 0 : i32
    %c0_i32_1 = arith.constant 0 : i32
    return %c0_i32, %c0_i32_0 : i32, i32
  }
  func.func @transform_6(%arg0: i32) -> (i32, i32) {
    %c0_i32 = arith.constant 0 : i32
    %c0_i32_0 = arith.constant 0 : i32
    %c0_i32_1 = arith.constant 0 : i32
    return %c0_i32, %c0_i32_0 : i32, i32
  }
  func.func @transform_7(%arg0: i32) -> (i32, i32) {
    %c0_i32 = arith.constant 0 : i32
    %c0_i32_0 = arith.constant 0 : i32
    %c0_i32_1 = arith.constant 0 : i32
    return %c0_i32, %c0_i32_0 : i32, i32
  }
  func.func @transform_8(%arg0: i32) -> (i32, i32) {
    %c0_i32 = arith.constant 0 : i32
    %c0_i32_0 = arith.constant 0 : i32
    %c0_i32_1 = arith.constant 0 : i32
    return %c0_i32, %c0_i32_0 : i32, i32
  }
  func.func @transform_9(%arg0: i32) -> (i32, i32) {
    %c0_i32 = arith.constant 0 : i32
    %c0_i32_0 = arith.constant 0 : i32
    return %c0_i32, %arg0 : i32, i32
  }
}

</mosaic_0001>

<llo_original>
// kernel: tpu_custom_call.1
$region0: #{tpu_custom_call.1}
  #allocation0 [shape = 'u32[]', space=smem, size = 0x4, offset = 0x4, fixed_abs, tag = 'smem constant byte address 0x4 - core index']
  #allocation1 [shape = 'u32[72,128]{1,0:T(1,128)}', space=vmem, size = 0x9000, scoped, tag = 'internal scratch']
  %s0 = inlined_call_operand.vmem [shape: f32[4,128], index: 0, kind: input, shape index: {}]
  %s1 = inlined_call_operand.vmem [shape: f32[224,4], index: 1, kind: input, shape index: {}]
  %s2 = inlined_call_operand.vmem [shape: f32[224,1], index: 2, kind: input, shape index: {}]
  %s3 = inlined_call_operand.vmem [shape: bf16[256,128], index: 3, kind: input, shape index: {}]
  %s4 = inlined_call_operand.vmem [shape: f32[256,1], index: 4, kind: input, shape index: {}]
  %s5 = inlined_call_operand.vmem [shape: bf16[128,256], index: 5, kind: input, shape index: {}]
  %s6 = inlined_call_operand.vmem [shape: f32[128,1], index: 6, kind: input, shape index: {}]
  %s7 = inlined_call_operand.vmem [shape: f32[12,224], index: 7, kind: input, shape index: {}]
  %s8 = inlined_call_operand.vmem [shape: f32[12,1], index: 8, kind: input, shape index: {}]
  %s9 = inlined_call_operand.hbm [shape: f32[3,128], index: 9, kind: output, shape index: {}]
  %s10 = sld [smem:[#allocation0]]
  $region46: #{tpu_custom_call.1} parent=0
    _
  %s12 = ssub.s32 1, %s10
  %s13 = scalar_select 0, %s12, %s10
  $region1: #{tpu_custom_call.1} parent=0
    #allocation2 [shape = 'u8[2048]{0}', space=vmem, size = 0x800, scoped, tag = 'output window, operand 0, single buffered']
    #allocation3 [shape = 's32[1]{0}', space=sflag, size = 0x4, scoped, tag = 'scoped memory for tpu_custom_call.1']
    %14 = vsyncpa [#allocation3], 0
    // Predicated region
    $region2: #{tpu_custom_call.1} parent=1 // pred_check
      _
    $region3: #{tpu_custom_call.1} parent=1 // pred_check_branch
      %16 = sbr.rel (0) target = $region5
    $region4: #{tpu_custom_call.1} parent=1 // pred_region
      _
    $region5: #{tpu_custom_call.1} parent=1 // pred_fallthru
      _
    // Predicated region
    $region6: #{tpu_custom_call.1} parent=1 // pred_check
      _
    $region7: #{tpu_custom_call.1} parent=1 // pred_check_branch
      %18 = sbr.rel (0) target = $region9
    $region8: #{tpu_custom_call.1} parent=1 // pred_region
      _
    $region9: #{tpu_custom_call.1} parent=1 // pred_fallthru
      _
    // Predicated region
    $region10: #{tpu_custom_call.1} parent=1 // pred_check
      _
    $region11: #{tpu_custom_call.1} parent=1 // pred_check_branch
      %20 = sbr.rel (0) target = $region13
    $region12: #{tpu_custom_call.1} parent=1 // pred_region
      _
    $region13: #{tpu_custom_call.1} parent=1 // pred_fallthru
      _
    // Predicated region
    $region14: #{tpu_custom_call.1} parent=1 // pred_check
      _
    $region15: #{tpu_custom_call.1} parent=1 // pred_check_branch
      %22 = sbr.rel (0) target = $region17
    $region16: #{tpu_custom_call.1} parent=1 // pred_region
      _
    $region17: #{tpu_custom_call.1} parent=1 // pred_fallthru
      _
    // Predicated region
    $region18: #{tpu_custom_call.1} parent=1 // pred_check
      _
    $region19: #{tpu_custom_call.1} parent=1 // pred_check_branch
      %24 = sbr.rel (0) target = $region21
    $region20: #{tpu_custom_call.1} parent=1 // pred_region
      _
    $region21: #{tpu_custom_call.1} parent=1 // pred_fallthru
      _
    // Predicated region
    $region22: #{tpu_custom_call.1} parent=1 // pred_check
      _
    $region23: #{tpu_custom_call.1} parent=1 // pred_check_branch
      %26 = sbr.rel (0) target = $region25
    $region24: #{tpu_custom_call.1} parent=1 // pred_region
      _
    $region25: #{tpu_custom_call.1} parent=1 // pred_fallthru
      _
    // Predicated region
    $region26: #{tpu_custom_call.1} parent=1 // pred_check
      _
    $region27: #{tpu_custom_call.1} parent=1 // pred_check_branch
      %28 = sbr.rel (0) target = $region29
    $region28: #{tpu_custom_call.1} parent=1 // pred_region
      _
    $region29: #{tpu_custom_call.1} parent=1 // pred_fallthru
      _
    // Predicated region
    $region30: #{tpu_custom_call.1} parent=1 // pred_check
      _
    $region31: #{tpu_custom_call.1} parent=1 // pred_check_branch
      %30 = sbr.rel (0) target = $region33
    $region32: #{tpu_custom_call.1} parent=1 // pred_region
      _
    $region33: #{tpu_custom_call.1} parent=1 // pred_fallthru
      _
    // Predicated region
    $region34: #{tpu_custom_call.1} parent=1 // pred_check
      _
    $region35: #{tpu_custom_call.1} parent=1 // pred_check_branch
      %32 = sbr.rel (0) target = $region37
    $region36: #{tpu_custom_call.1} parent=1 // pred_region
      _
    $region37: #{tpu_custom_call.1} parent=1 // pred_fallthru
      _
    %v33 = vld [vmem:[%s0] sm:$0xf]
    %v34 = vld [vmem:[%s2] sm:$0xff]
    %v35 = vld [vmem:[%s2 + $0x8] sm:$0xff]
    %v36 = vld [vmem:[%s2 + $0x10] sm:$0xff]
    %v37 = vld [vmem:[%s2 + $0x18] sm:$0xff]
    %v38 = vld [vmem:[%s2 + $0x20] sm:$0xff]
    %v39 = vld [vmem:[%s2 + $0x28] sm:$0xff]
    %v40 = vld [vmem:[%s2 + $0x30] sm:$0xff]
    %v41 = vld [vmem:[%s2 + $0x38] sm:$0xff]
    %v42 = vld [vmem:[%s2 + $0x40] sm:$0xff]
    %v43 = vld [vmem:[%s2 + $0x48] sm:$0xff]
    %v44 = vld [vmem:[%s2 + $0x50] sm:$0xff]
    %v45 = vld [vmem:[%s2 + $0x58] sm:$0xff]
    %v46 = vld [vmem:[%s2 + $0x60] sm:$0xff]
    %v47 = vld [vmem:[%s2 + $0x68] sm:$0xff]
    %v48 = vld [vmem:[%s2 + $0x70] sm:$0xff]
    %v49 = vld [vmem:[%s2 + $0x78] sm:$0xff]
    %v50 = vld [vmem:[%s2 + $0x80] sm:$0xff]
    %v51 = vld [vmem:[%s2 + $0x88] sm:$0xff]
    %v52 = vld [vmem:[%s2 + $0x90] sm:$0xff]
    %v53 = vld [vmem:[%s2 + $0x98] sm:$0xff]
    %v54 = vld [vmem:[%s2 + $0xa0] sm:$0xff]
    %v55 = vld [vmem:[%s2 + $0xa8] sm:$0xff]
    %v56 = vld [vmem:[%s2 + $0xb0] sm:$0xff]
    %v57 = vld [vmem:[%s2 + $0xb8] sm:$0xff]
    %v58 = vld [vmem:[%s2 + $0xc0] sm:$0xff]
    %v59 = vld [vmem:[%s2 + $0xc8] sm:$0xff]
    %v60 = vld [vmem:[%s2 + $0xd0] sm:$0xff]
    %v61 = vld [vmem:[%s2 + $0xd8] sm:$0xff]
    %v62 = vld [vmem:[%s1] sm:$0xff]
    %v63 = vld [vmem:[%s1 + $0x8] sm:$0xff]
    %v64 = vld [vmem:[%s1 + $0x10] sm:$0xff]
    %v65 = vld [vmem:[%s1 + $0x18] sm:$0xff]
    %v66 = vld [vmem:[%s1 + $0x20] sm:$0xff]
    %v67 = vld [vmem:[%s1 + $0x28] sm:$0xff]
    %v68 = vld [vmem:[%s1 + $0x30] sm:$0xff]
    %v69 = vld [vmem:[%s1 + $0x38] sm:$0xff]
    %v70 = vld [vmem:[%s1 + $0x40] sm:$0xff]
    %v71 = vld [vmem:[%s1 + $0x48] sm:$0xff]
    %v72 = vld [vmem:[%s1 + $0x50] sm:$0xff]
    %v73 = vld [vmem:[%s1 + $0x58] sm:$0xff]
    %v74 = vld [vmem:[%s1 + $0x60] sm:$0xff]
    %v75 = vld [vmem:[%s1 + $0x68] sm:$0xff]
    %v76 = vld [vmem:[%s1 + $0x70] sm:$0xff]
    %v77 = vld [vmem:[%s1 + $0x78] sm:$0xff]
    %v78 = vld [vmem:[%s1 + $0x80] sm:$0xff]
    %v79 = vld [vmem:[%s1 + $0x88] sm:$0xff]
    %v80 = vld [vmem:[%s1 + $0x90] sm:$0xff]
    %v81 = vld [vmem:[%s1 + $0x98] sm:$0xff]
    %v82 = vld [vmem:[%s1 + $0xa0] sm:$0xff]
    %v83 = vld [vmem:[%s1 + $0xa8] sm:$0xff]
    %v84 = vld [vmem:[%s1 + $0xb0] sm:$0xff]
    %v85 = vld [vmem:[%s1 + $0xb8] sm:$0xff]
    %v86 = vld [vmem:[%s1 + $0xc0] sm:$0xff]
    %v87 = vld [vmem:[%s1 + $0xc8] sm:$0xff]
    %v88 = vld [vmem:[%s1 + $0xd0] sm:$0xff]
    %v89 = vld [vmem:[%s1 + $0xd8] sm:$0xff]
    %91 = vset.pattern.permute.xlu0 0
    %92 = vperm.xlu0 %91, %v62
    %v93 = vpop.permute.xlu0 %92
    %96 = vset.pattern.permute.xlu0 0
    %97 = vperm.xlu0 %96, %v63
    %v98 = vpop.permute.xlu0 %97
    %101 = vset.pattern.permute.xlu0 0
    %102 = vperm.xlu0 %101, %v64
    %v103 = vpop.permute.xlu0 %102
    %106 = vset.pattern.permute.xlu0 0
    %107 = vperm.xlu0 %106, %v65
    %v108 = vpop.permute.xlu0 %107
    %111 = vset.pattern.permute.xlu0 0
    %112 = vperm.xlu0 %111, %v66
    %v113 = vpop.permute.xlu0 %112
    %116 = vset.pattern.permute.xlu0 0
    %117 = vperm.xlu0 %116, %v67
    %v118 = vpop.permute.xlu0 %117
    %121 = vset.pattern.permute.xlu0 0
    %122 = vperm.xlu0 %121, %v68
    %v123 = vpop.permute.xlu0 %122
    %126 = vset.pattern.permute.xlu0 0
    %127 = vperm.xlu0 %126, %v69
    %v128 = vpop.permute.xlu0 %127
    %131 = vset.pattern.permute.xlu0 0
    %132 = vperm.xlu0 %131, %v70
    %v133 = vpop.permute.xlu0 %132
    %136 = vset.pattern.permute.xlu0 0
    %137 = vperm.xlu0 %136, %v71
    %v138 = vpop.permute.xlu0 %137
    %141 = vset.pattern.permute.xlu0 0
    %142 = vperm.xlu0 %141, %v72
    %v143 = vpop.permute.xlu0 %142
    %146 = vset.pattern.permute.xlu0 0
    %147 = vperm.xlu0 %146, %v73
    %v148 = vpop.permute.xlu0 %147
    %151 = vset.pattern.permute.xlu0 0
    %152 = vperm.xlu0 %151, %v74
    %v153 = vpop.permute.xlu0 %152
    %156 = vset.pattern.permute.xlu0 0
    %157 = vperm.xlu0 %156, %v75
    %v158 = vpop.permute.xlu0 %157
    %161 = vset.pattern.permute.xlu0 0
    %162 = vperm.xlu0 %161, %v76
    %v163 = vpop.permute.xlu0 %162
    %166 = vset.pattern.permute.xlu0 0
    %167 = vperm.xlu0 %166, %v77
    %v168 = vpop.permute.xlu0 %167
    %171 = vset.pattern.permute.xlu0 0
    %172 = vperm.xlu0 %171, %v78
    %v173 = vpop.permute.xlu0 %172
    %176 = vset.pattern.permute.xlu0 0
    %177 = vperm.xlu0 %176, %v79
    %v178 = vpop.permute.xlu0 %177
    %181 = vset.pattern.permute.xlu0 0
    %182 = vperm.xlu0 %181, %v80
    %v183 = vpop.permute.xlu0 %182
    %186 = vset.pattern.permute.xlu0 0
    %187 = vperm.xlu0 %186, %v81
    %v188 = vpop.permute.xlu0 %187
    %191 = vset.pattern.permute.xlu0 0
    %192 = vperm.xlu0 %191, %v82
    %v193 = vpop.permute.xlu0 %192
    %196 = vset.pattern.permute.xlu0 0
    %197 = vperm.xlu0 %196, %v83
    %v198 = vpop.permute.xlu0 %197
    %201 = vset.pattern.permute.xlu0 0
    %202 = vperm.xlu0 %201, %v84
    %v203 = vpop.permute.xlu0 %202
    %206 = vset.pattern.permute.xlu0 0
    %207 = vperm.xlu0 %206, %v85
    %v208 = vpop.permute.xlu0 %207
    %211 = vset.pattern.permute.xlu0 0
    %212 = vperm.xlu0 %211, %v86
    %v213 = vpop.permute.xlu0 %212
    %216 = vset.pattern.permute.xlu0 0
    %217 = vperm.xlu0 %216, %v87
    %v218 = vpop.permute.xlu0 %217
    %221 = vset.pattern.permute.xlu0 0
    %222 = vperm.xlu0 %221, %v88
    %v223 = vpop.permute.xlu0 %222
    %226 = vset.pattern.permute.xlu0 0
    %227 = vperm.xlu0 %226, %v89
    %v228 = vpop.permute.xlu0 %227
    %v230 = vperm.slane %v33, 0
    %v231 = vmul.f32 %v93, %v230
    %v232 = vmul.f32 %v98, %v230
    %v233 = vmul.f32 %v103, %v230
    %v234 = vmul.f32 %v108, %v230
    %v235 = vmul.f32 %v113, %v230
    %v236 = vmul.f32 %v118, %v230
    %v237 = vmul.f32 %v123, %v230
    %v238 = vmul.f32 %v128, %v230
    %v239 = vmul.f32 %v133, %v230
    %v240 = vmul.f32 %v138, %v230
    %v241 = vmul.f32 %v143, %v230
    %v242 = vmul.f32 %v148, %v230
    %v243 = vmul.f32 %v153, %v230
    %v244 = vmul.f32 %v158, %v230
    %v245 = vmul.f32 %v163, %v230
    %v246 = vmul.f32 %v168, %v230
    %v247 = vmul.f32 %v173, %v230
    %v248 = vmul.f32 %v178, %v230
    %v249 = vmul.f32 %v183, %v230
    %v250 = vmul.f32 %v188, %v230
    %v251 = vmul.f32 %v193, %v230
    %v252 = vmul.f32 %v198, %v230
    %v253 = vmul.f32 %v203, %v230
    %v254 = vmul.f32 %v208, %v230
    %v255 = vmul.f32 %v213, %v230
    %v256 = vmul.f32 %v218, %v230
    %v257 = vmul.f32 %v223, %v230
    %v258 = vmul.f32 %v228, %v230
    %260 = vset.pattern.permute.xlu0 0
    %261 = vperm.xlu0 %260, %v34
    %v262 = vpop.permute.xlu0 %261
    %265 = vset.pattern.permute.xlu0 0
    %266 = vperm.xlu0 %265, %v35
    %v267 = vpop.permute.xlu0 %266
    %270 = vset.pattern.permute.xlu0 0
    %271 = vperm.xlu0 %270, %v36
    %v272 = vpop.permute.xlu0 %271
    %275 = vset.pattern.permute.xlu0 0
    %276 = vperm.xlu0 %275, %v37
    %v277 = vpop.permute.xlu0 %276
    %280 = vset.pattern.permute.xlu0 0
    %281 = vperm.xlu0 %280, %v38
    %v282 = vpop.permute.xlu0 %281
    %285 = vset.pattern.permute.xlu0 0
    %286 = vperm.xlu0 %285, %v39
    %v287 = vpop.permute.xlu0 %286
    %290 = vset.pattern.permute.xlu0 0
    %291 = vperm.xlu0 %290, %v40
    %v292 = vpop.permute.xlu0 %291
    %295 = vset.pattern.permute.xlu0 0
    %296 = vperm.xlu0 %295, %v41
    %v297 = vpop.permute.xlu0 %296
    %300 = vset.pattern.permute.xlu0 0
    %301 = vperm.xlu0 %300, %v42
    %v302 = vpop.permute.xlu0 %301
    %305 = vset.pattern.permute.xlu0 0
    %306 = vperm.xlu0 %305, %v43
    %v307 = vpop.permute.xlu0 %306
    %310 = vset.pattern.permute.xlu0 0
    %311 = vperm.xlu0 %310, %v44
    %v312 = vpop.permute.xlu0 %311
    %315 = vset.pattern.permute.xlu0 0
    %316 = vperm.xlu0 %315, %v45
    %v317 = vpop.permute.xlu0 %316
    %320 = vset.pattern.permute.xlu0 0
    %321 = vperm.xlu0 %320, %v46
    %v322 = vpop.permute.xlu0 %321
    %325 = vset.pattern.permute.xlu0 0
    %326 = vperm.xlu0 %325, %v47
    %v327 = vpop.permute.xlu0 %326
    %330 = vset.pattern.permute.xlu0 0
    %331 = vperm.xlu0 %330, %v48
    %v332 = vpop.permute.xlu0 %331
    %335 = vset.pattern.permute.xlu0 0
    %336 = vperm.xlu0 %335, %v49
    %v337 = vpop.permute.xlu0 %336
    %340 = vset.pattern.permute.xlu0 0
    %341 = vperm.xlu0 %340, %v50
    %v342 = vpop.permute.xlu0 %341
    %345 = vset.pattern.permute.xlu0 0
    %346 = vperm.xlu0 %345, %v51
    %v347 = vpop.permute.xlu0 %346
    %350 = vset.pattern.permute.xlu0 0
    %351 = vperm.xlu0 %350, %v52
    %v352 = vpop.permute.xlu0 %351
    %355 = vset.pattern.permute.xlu0 0
    %356 = vperm.xlu0 %355, %v53
    %v357 = vpop.permute.xlu0 %356
    %360 = vset.pattern.permute.xlu0 0
    %361 = vperm.xlu0 %360, %v54
    %v362 = vpop.permute.xlu0 %361
    %365 = vset.pattern.permute.xlu0 0
    %366 = vperm.xlu0 %365, %v55
    %v367 = vpop.permute.xlu0 %366
    %370 = vset.pattern.permute.xlu0 0
    %371 = vperm.xlu0 %370, %v56
    %v372 = vpop.permute.xlu0 %371
    %375 = vset.pattern.permute.xlu0 0
    %376 = vperm.xlu0 %375, %v57
    %v377 = vpop.permute.xlu0 %376
    %380 = vset.pattern.permute.xlu0 0
    %381 = vperm.xlu0 %380, %v58
    %v382 = vpop.permute.xlu0 %381
    %385 = vset.pattern.permute.xlu0 0
    %386 = vperm.xlu0 %385, %v59
    %v387 = vpop.permute.xlu0 %386
    %390 = vset.pattern.permute.xlu0 0
    %391 = vperm.xlu0 %390, %v60
    %v392 = vpop.permute.xlu0 %391
    %395 = vset.pattern.permute.xlu0 0
    %396 = vperm.xlu0 %395, %v61
    %v397 = vpop.permute.xlu0 %396
    %v399 = vadd.f32 %v262, %v231
    %v400 = vadd.f32 %v267, %v232
    %v401 = vadd.f32 %v272, %v233
    %v402 = vadd.f32 %v277, %v234
    %v403 = vadd.f32 %v282, %v235
    %v404 = vadd.f32 %v287, %v236
    %v405 = vadd.f32 %v292, %v237
    %v406 = vadd.f32 %v297, %v238
    %v407 = vadd.f32 %v302, %v239
    %v408 = vadd.f32 %v307, %v240
    %v409 = vadd.f32 %v312, %v241
    %v410 = vadd.f32 %v317, %v242
    %v411 = vadd.f32 %v322, %v243
    %v412 = vadd.f32 %v327, %v244
    %v413 = vadd.f32 %v332, %v245
    %v414 = vadd.f32 %v337, %v246
    %v415 = vadd.f32 %v342, %v247
    %v416 = vadd.f32 %v347, %v248
    %v417 = vadd.f32 %v352, %v249
    %v418 = vadd.f32 %v357, %v250
    %v419 = vadd.f32 %v362, %v251
    %v420 = vadd.f32 %v367, %v252
    %v421 = vadd.f32 %v372, %v253
    %v422 = vadd.f32 %v377, %v254
    %v423 = vadd.f32 %v382, %v255
    %v424 = vadd.f32 %v387, %v256
    %v425 = vadd.f32 %v392, %v257
    %v426 = vadd.f32 %v397, %v258
    %427 = vset.pattern.permute.xlu0 1
    %428 = vperm.xlu0 %427, %v62
    %v429 = vpop.permute.xlu0 %428
    %431 = vset.pattern.permute.xlu0 1
    %432 = vperm.xlu0 %431, %v63
    %v433 = vpop.permute.xlu0 %432
    %435 = vset.pattern.permute.xlu0 1
    %436 = vperm.xlu0 %435, %v64
    %v437 = vpop.permute.xlu0 %436
    %439 = vset.pattern.permute.xlu0 1
    %440 = vperm.xlu0 %439, %v65
    %v441 = vpop.permute.xlu0 %440
    %443 = vset.pattern.permute.xlu0 1
    %444 = vperm.xlu0 %443, %v66
    %v445 = vpop.permute.xlu0 %444
    %447 = vset.pattern.permute.xlu0 1
    %448 = vperm.xlu0 %447, %v67
    %v449 = vpop.permute.xlu0 %448
    %451 = vset.pattern.permute.xlu0 1
    %452 = vperm.xlu0 %451, %v68
    %v453 = vpop.permute.xlu0 %452
    %455 = vset.pattern.permute.xlu0 1
    %456 = vperm.xlu0 %455, %v69
    %v457 = vpop.permute.xlu0 %456
    %459 = vset.pattern.permute.xlu0 1
    %460 = vperm.xlu0 %459, %v70
    %v461 = vpop.permute.xlu0 %460
    %463 = vset.pattern.permute.xlu0 1
    %464 = vperm.xlu0 %463, %v71
    %v465 = vpop.permute.xlu0 %464
    %467 = vset.pattern.permute.xlu0 1
    %468 = vperm.xlu0 %467, %v72
    %v469 = vpop.permute.xlu0 %468
    %471 = vset.pattern.permute.xlu0 1
    %472 = vperm.xlu0 %471, %v73
    %v473 = vpop.permute.xlu0 %472
    %475 = vset.pattern.permute.xlu0 1
    %476 = vperm.xlu0 %475, %v74
    %v477 = vpop.permute.xlu0 %476
    %479 = vset.pattern.permute.xlu0 1
    %480 = vperm.xlu0 %479, %v75
    %v481 = vpop.permute.xlu0 %480
    %483 = vset.pattern.permute.xlu0 1
    %484 = vperm.xlu0 %483, %v76
    %v485 = vpop.permute.xlu0 %484
    %487 = vset.pattern.permute.xlu0 1
    %488 = vperm.xlu0 %487, %v77
    %v489 = vpop.permute.xlu0 %488
    %491 = vset.pattern.permute.xlu0 1
    %492 = vperm.xlu0 %491, %v78
    %v493 = vpop.permute.xlu0 %492
    %495 = vset.pattern.permute.xlu0 1
    %496 = vperm.xlu0 %495, %v79
    %v497 = vpop.permute.xlu0 %496
    %499 = vset.pattern.permute.xlu0 1
    %500 = vperm.xlu0 %499, %v80
    %v501 = vpop.permute.xlu0 %500
    %503 = vset.pattern.permute.xlu0 1
    %504 = vperm.xlu0 %503, %v81
    %v505 = vpop.permute.xlu0 %504
    %507 = vset.pattern.permute.xlu0 1
    %508 = vperm.xlu0 %507, %v82
    %v509 = vpop.permute.xlu0 %508
    %511 = vset.pattern.permute.xlu0 1
    %512 = vperm.xlu0 %511, %v83
    %v513 = vpop.permute.xlu0 %512
    %515 = vset.pattern.permute.xlu0 1
    %516 = vperm.xlu0 %515, %v84
    %v517 = vpop.permute.xlu0 %516
    %519 = vset.pattern.permute.xlu0 1
    %520 = vperm.xlu0 %519, %v85
    %v521 = vpop.permute.xlu0 %520
    %523 = vset.pattern.permute.xlu0 1
    %524 = vperm.xlu0 %523, %v86
    %v525 = vpop.permute.xlu0 %524
    %527 = vset.pattern.permute.xlu0 1
    %528 = vperm.xlu0 %527, %v87
    %v529 = vpop.permute.xlu0 %528
    %531 = vset.pattern.permute.xlu0 1
    %532 = vperm.xlu0 %531, %v88
    %v533 = vpop.permute.xlu0 %532
    %535 = vset.pattern.permute.xlu0 1
    %536 = vperm.xlu0 %535, %v89
    %v537 = vpop.permute.xlu0 %536
    %v539 = vperm.slane %v33, 1
    %v540 = vmul.f32 %v429, %v539
    %v541 = vmul.f32 %v433, %v539
    %v542 = vmul.f32 %v437, %v539
    %v543 = vmul.f32 %v441, %v539
    %v544 = vmul.f32 %v445, %v539
    %v545 = vmul.f32 %v449, %v539
    %v546 = vmul.f32 %v453, %v539
    %v547 = vmul.f32 %v457, %v539
    %v548 = vmul.f32 %v461, %v539
    %v549 = vmul.f32 %v465, %v539
    %v550 = vmul.f32 %v469, %v539
    %v551 = vmul.f32 %v473, %v539
    %v552 = vmul.f32 %v477, %v539
    %v553 = vmul.f32 %v481, %v539
    %v554 = vmul.f32 %v485, %v539
    %v555 = vmul.f32 %v489, %v539
    %v556 = vmul.f32 %v493, %v539
    %v557 = vmul.f32 %v497, %v539
    %v558 = vmul.f32 %v501, %v539
    %v559 = vmul.f32 %v505, %v539
    %v560 = vmul.f32 %v509, %v539
    %v561 = vmul.f32 %v513, %v539
    %v562 = vmul.f32 %v517, %v539
    %v563 = vmul.f32 %v521, %v539
    %v564 = vmul.f32 %v525, %v539
    %v565 = vmul.f32 %v529, %v539
    %v566 = vmul.f32 %v533, %v539
    %v567 = vmul.f32 %v537, %v539
    %v568 = vadd.f32 %v399, %v540
    %v569 = vadd.f32 %v400, %v541
    %v570 = vadd.f32 %v401, %v542
    %v571 = vadd.f32 %v402, %v543
    %v572 = vadd.f32 %v403, %v544
    %v573 = vadd.f32 %v404, %v545
    %v574 = vadd.f32 %v405, %v546
    %v575 = vadd.f32 %v406, %v547
    %v576 = vadd.f32 %v407, %v548
    %v577 = vadd.f32 %v408, %v549
    %v578 = vadd.f32 %v409, %v550
    %v579 = vadd.f32 %v410, %v551
    %v580 = vadd.f32 %v411, %v552
    %v581 = vadd.f32 %v412, %v553
    %v582 = vadd.f32 %v413, %v554
    %v583 = vadd.f32 %v414, %v555
    %v584 = vadd.f32 %v415, %v556
    %v585 = vadd.f32 %v416, %v557
    %v586 = vadd.f32 %v417, %v558
    %v587 = vadd.f32 %v418, %v559
    %v588 = vadd.f32 %v419, %v560
    %v589 = vadd.f32 %v420, %v561
    %v590 = vadd.f32 %v421, %v562
    %v591 = vadd.f32 %v422, %v563
    %v592 = vadd.f32 %v423, %v564
    %v593 = vadd.f32 %v424, %v565
    %v594 = vadd.f32 %v425, %v566
    %v595 = vadd.f32 %v426, %v567
    %596 = vset.pattern.permute.xlu0 2
    %597 = vperm.xlu0 %596, %v62
    %v598 = vpop.permute.xlu0 %597
    %600 = vset.pattern.permute.xlu0 2
    %601 = vperm.xlu0 %600, %v63
    %v602 = vpop.permute.xlu0 %601
    %604 = vset.pattern.permute.xlu0 2
    %605 = vperm.xlu0 %604, %v64
    %v606 = vpop.permute.xlu0 %605
    %608 = vset.pattern.permute.xlu0 2
    %609 = vperm.xlu0 %608, %v65
    %v610 = vpop.permute.xlu0 %609
    %612 = vset.pattern.permute.xlu0 2
    %613 = vperm.xlu0 %612, %v66
    %v614 = vpop.permute.xlu0 %613
    %616 = vset.pattern.permute.xlu0 2
    %617 = vperm.xlu0 %616, %v67
    %v618 = vpop.permute.xlu0 %617
    %620 = vset.pattern.permute.xlu0 2
    %621 = vperm.xlu0 %620, %v68
    %v622 = vpop.permute.xlu0 %621
    %624 = vset.pattern.permute.xlu0 2
    %625 = vperm.xlu0 %624, %v69
    %v626 = vpop.permute.xlu0 %625
    %628 = vset.pattern.permute.xlu0 2
    %629 = vperm.xlu0 %628, %v70
    %v630 = vpop.permute.xlu0 %629
    %632 = vset.pattern.permute.xlu0 2
    %633 = vperm.xlu0 %632, %v71
    %v634 = vpop.permute.xlu0 %633
    %636 = vset.pattern.permute.xlu0 2
    %637 = vperm.xlu0 %636, %v72
    %v638 = vpop.permute.xlu0 %637
    %640 = vset.pattern.permute.xlu0 2
    %641 = vperm.xlu0 %640, %v73
    %v642 = vpop.permute.xlu0 %641
    %644 = vset.pattern.permute.xlu0 2
    %645 = vperm.xlu0 %644, %v74
    %v646 = vpop.permute.xlu0 %645
    %648 = vset.pattern.permute.xlu0 2
    %649 = vperm.xlu0 %648, %v75
    %v650 = vpop.permute.xlu0 %649
    %652 = vset.pattern.permute.xlu0 2
    %653 = vperm.xlu0 %652, %v76
    %v654 = vpop.permute.xlu0 %653
    %656 = vset.pattern.permute.xlu0 2
    %657 = vperm.xlu0 %656, %v77
    %v658 = vpop.permute.xlu0 %657
    %660 = vset.pattern.permute.xlu0 2
    %661 = vperm.xlu0 %660, %v78
    %v662 = vpop.permute.xlu0 %661
    %664 = vset.pattern.permute.xlu0 2
    %665 = vperm.xlu0 %664, %v79
    %v666 = vpop.permute.xlu0 %665
    %668 = vset.pattern.permute.xlu0 2
    %669 = vperm.xlu0 %668, %v80
    %v670 = vpop.permute.xlu0 %669
    %672 = vset.pattern.permute.xlu0 2
    %673 = vperm.xlu0 %672, %v81
    %v674 = vpop.permute.xlu0 %673
    %676 = vset.pattern.permute.xlu0 2
    %677 = vperm.xlu0 %676, %v82
    %v678 = vpop.permute.xlu0 %677
    %680 = vset.pattern.permute.xlu0 2
    %681 = vperm.xlu0 %680, %v83
    %v682 = vpop.permute.xlu0 %681
    %684 = vset.pattern.permute.xlu0 2
    %685 = vperm.xlu0 %684, %v84
    %v686 = vpop.permute.xlu0 %685
    %688 = vset.pattern.permute.xlu0 2
    %689 = vperm.xlu0 %688, %v85
    %v690 = vpop.permute.xlu0 %689
    %692 = vset.pattern.permute.xlu0 2
    %693 = vperm.xlu0 %692, %v86
    %v694 = vpop.permute.xlu0 %693
    %696 = vset.pattern.permute.xlu0 2
    %697 = vperm.xlu0 %696, %v87
    %v698 = vpop.permute.xlu0 %697
    %700 = vset.pattern.permute.xlu0 2
    %701 = vperm.xlu0 %700, %v88
    %v702 = vpop.permute.xlu0 %701
    %704 = vset.pattern.permute.xlu0 2
    %705 = vperm.xlu0 %704, %v89
    %v706 = vpop.permute.xlu0 %705
    %v708 = vperm.slane %v33, 2
    %v709 = vmul.f32 %v598, %v708
    %v710 = vmul.f32 %v602, %v708
    %v711 = vmul.f32 %v606, %v708
    %v712 = vmul.f32 %v610, %v708
    %v713 = vmul.f32 %v614, %v708
    %v714 = vmul.f32 %v618, %v708
    %v715 = vmul.f32 %v622, %v708
    %v716 = vmul.f32 %v626, %v708
    %v717 = vmul.f32 %v630, %v708
    %v718 = vmul.f32 %v634, %v708
    %v719 = vmul.f32 %v638, %v708
    %v720 = vmul.f32 %v642, %v708
    %v721 = vmul.f32 %v646, %v708
    %v722 = vmul.f32 %v650, %v708
    %v723 = vmul.f32 %v654, %v708
    %v724 = vmul.f32 %v658, %v708
    %v725 = vmul.f32 %v662, %v708
    %v726 = vmul.f32 %v666, %v708
    %v727 = vmul.f32 %v670, %v708
    %v728 = vmul.f32 %v674, %v708
    %v729 = vmul.f32 %v678, %v708
    %v730 = vmul.f32 %v682, %v708
    %v731 = vmul.f32 %v686, %v708
    %v732 = vmul.f32 %v690, %v708
    %v733 = vmul.f32 %v694, %v708
    %v734 = vmul.f32 %v698, %v708
    %v735 = vmul.f32 %v702, %v708
    %v736 = vmul.f32 %v706, %v708
    %v737 = vadd.f32 %v568, %v709
    %v738 = vadd.f32 %v569, %v710
    %v739 = vadd.f32 %v570, %v711
    %v740 = vadd.f32 %v571, %v712
    %v741 = vadd.f32 %v572, %v713
    %v742 = vadd.f32 %v573, %v714
    %v743 = vadd.f32 %v574, %v715
    %v744 = vadd.f32 %v575, %v716
    %v745 = vadd.f32 %v576, %v717
    %v746 = vadd.f32 %v577, %v718
    %v747 = vadd.f32 %v578, %v719
    %v748 = vadd.f32 %v579, %v720
    %v749 = vadd.f32 %v580, %v721
    %v750 = vadd.f32 %v581, %v722
    %v751 = vadd.f32 %v582, %v723
    %v752 = vadd.f32 %v583, %v724
    %v753 = vadd.f32 %v584, %v725
    %v754 = vadd.f32 %v585, %v726
    %v755 = vadd.f32 %v586, %v727
    %v756 = vadd.f32 %v587, %v728
    %v757 = vadd.f32 %v588, %v729
    %v758 = vadd.f32 %v589, %v730
    %v759 = vadd.f32 %v590, %v731
    %v760 = vadd.f32 %v591, %v732
    %v761 = vadd.f32 %v592, %v733
    %v762 = vadd.f32 %v593, %v734
    %v763 = vadd.f32 %v594, %v735
    %v764 = vadd.f32 %v595, %v736
    %765 = vset.pattern.permute.xlu0 3
    %766 = vperm.xlu0 %765, %v62
    %v767 = vpop.permute.xlu0 %766
    %769 = vset.pattern.permute.xlu0 3
    %770 = vperm.xlu0 %769, %v63
    %v771 = vpop.permute.xlu0 %770
    %773 = vset.pattern.permute.xlu0 3
    %774 = vperm.xlu0 %773, %v64
    %v775 = vpop.permute.xlu0 %774
    %777 = vset.pattern.permute.xlu0 3
    %778 = vperm.xlu0 %777, %v65
    %v779 = vpop.permute.xlu0 %778
    %781 = vset.pattern.permute.xlu0 3
    %782 = vperm.xlu0 %781, %v66
    %v783 = vpop.permute.xlu0 %782
    %785 = vset.pattern.permute.xlu0 3
    %786 = vperm.xlu0 %785, %v67
    %v787 = vpop.permute.xlu0 %786
    %789 = vset.pattern.permute.xlu0 3
    %790 = vperm.xlu0 %789, %v68
    %v791 = vpop.permute.xlu0 %790
    %793 = vset.pattern.permute.xlu0 3
    %794 = vperm.xlu0 %793, %v69
    %v795 = vpop.permute.xlu0 %794
    %797 = vset.pattern.permute.xlu0 3
    %798 = vperm.xlu0 %797, %v70
    %v799 = vpop.permute.xlu0 %798
    %801 = vset.pattern.permute.xlu0 3
    %802 = vperm.xlu0 %801, %v71
    %v803 = vpop.permute.xlu0 %802
    %805 = vset.pattern.permute.xlu0 3
    %806 = vperm.xlu0 %805, %v72
    %v807 = vpop.permute.xlu0 %806
    %809 = vset.pattern.permute.xlu0 3
    %810 = vperm.xlu0 %809, %v73
    %v811 = vpop.permute.xlu0 %810
    %813 = vset.pattern.permute.xlu0 3
    %814 = vperm.xlu0 %813, %v74
    %v815 = vpop.permute.xlu0 %814
    %817 = vset.pattern.permute.xlu0 3
    %818 = vperm.xlu0 %817, %v75
    %v819 = vpop.permute.xlu0 %818
    %821 = vset.pattern.permute.xlu0 3
    %822 = vperm.xlu0 %821, %v76
    %v823 = vpop.permute.xlu0 %822
    %825 = vset.pattern.permute.xlu0 3
    %826 = vperm.xlu0 %825, %v77
    %v827 = vpop.permute.xlu0 %826
    %829 = vset.pattern.permute.xlu0 3
    %830 = vperm.xlu0 %829, %v78
    %v831 = vpop.permute.xlu0 %830
    %833 = vset.pattern.permute.xlu0 3
    %834 = vperm.xlu0 %833, %v79
    %v835 = vpop.permute.xlu0 %834
    %837 = vset.pattern.permute.xlu0 3
    %838 = vperm.xlu0 %837, %v80
    %v839 = vpop.permute.xlu0 %838
    %841 = vset.pattern.permute.xlu0 3
    %842 = vperm.xlu0 %841, %v81
    %v843 = vpop.permute.xlu0 %842
    %845 = vset.pattern.permute.xlu0 3
    %846 = vperm.xlu0 %845, %v82
    %v847 = vpop.permute.xlu0 %846
    %849 = vset.pattern.permute.xlu0 3
    %850 = vperm.xlu0 %849, %v83
    %v851 = vpop.permute.xlu0 %850
    %853 = vset.pattern.permute.xlu0 3
    %854 = vperm.xlu0 %853, %v84
    %v855 = vpop.permute.xlu0 %854
    %857 = vset.pattern.permute.xlu0 3
    %858 = vperm.xlu0 %857, %v85
    %v859 = vpop.permute.xlu0 %858
    %861 = vset.pattern.permute.xlu0 3
    %862 = vperm.xlu0 %861, %v86
    %v863 = vpop.permute.xlu0 %862
    %865 = vset.pattern.permute.xlu0 3
    %866 = vperm.xlu0 %865, %v87
    %v867 = vpop.permute.xlu0 %866
    %869 = vset.pattern.permute.xlu0 3
    %870 = vperm.xlu0 %869, %v88
    %v871 = vpop.permute.xlu0 %870
    %873 = vset.pattern.permute.xlu0 3
    %874 = vperm.xlu0 %873, %v89
    %v875 = vpop.permute.xlu0 %874
    %v877 = vperm.slane %v33, 3
    %v878 = vmul.f32 %v767, %v877
    %v879 = vmul.f32 %v771, %v877
    %v880 = vmul.f32 %v775, %v877
    %v881 = vmul.f32 %v779, %v877
    %v882 = vmul.f32 %v783, %v877
    %v883 = vmul.f32 %v787, %v877
    %v884 = vmul.f32 %v791, %v877
    %v885 = vmul.f32 %v795, %v877
    %v886 = vmul.f32 %v799, %v877
    %v887 = vmul.f32 %v803, %v877
    %v888 = vmul.f32 %v807, %v877
    %v889 = vmul.f32 %v811, %v877
    %v890 = vmul.f32 %v815, %v877
    %v891 = vmul.f32 %v819, %v877
    %v892 = vmul.f32 %v823, %v877
    %v893 = vmul.f32 %v827, %v877
    %v894 = vmul.f32 %v831, %v877
    %v895 = vmul.f32 %v835, %v877
    %v896 = vmul.f32 %v839, %v877
    %v897 = vmul.f32 %v843, %v877
    %v898 = vmul.f32 %v847, %v877
    %v899 = vmul.f32 %v851, %v877
    %v900 = vmul.f32 %v855, %v877
    %v901 = vmul.f32 %v859, %v877
    %v902 = vmul.f32 %v863, %v877
    %v903 = vmul.f32 %v867, %v877
    %v904 = vmul.f32 %v871, %v877
    %v905 = vmul.f32 %v875, %v877
    %v906 = vadd.f32 %v737, %v878
    %v907 = vadd.f32 %v738, %v879
    %v908 = vadd.f32 %v739, %v880
    %v909 = vadd.f32 %v740, %v881
    %v910 = vadd.f32 %v741, %v882
    %v911 = vadd.f32 %v742, %v883
    %v912 = vadd.f32 %v743, %v884
    %v913 = vadd.f32 %v744, %v885
    %v914 = vadd.f32 %v745, %v886
    %v915 = vadd.f32 %v746, %v887
    %v916 = vadd.f32 %v747, %v888
    %v917 = vadd.f32 %v748, %v889
    %v918 = vadd.f32 %v749, %v890
    %v919 = vadd.f32 %v750, %v891
    %v920 = vadd.f32 %v751, %v892
    %v921 = vadd.f32 %v752, %v893
    %v922 = vadd.f32 %v753, %v894
    %v923 = vadd.f32 %v754, %v895
    %v924 = vadd.f32 %v755, %v896
    %v925 = vadd.f32 %v756, %v897
    %v926 = vadd.f32 %v757, %v898
    %v927 = vadd.f32 %v758, %v899
    %v928 = vadd.f32 %v759, %v900
    %v929 = vadd.f32 %v760, %v901
    %v930 = vadd.f32 %v761, %v902
    %v931 = vadd.f32 %v762, %v903
    %v932 = vadd.f32 %v763, %v904
    %v933 = vadd.f32 %v764, %v905
    %v934 = vmax.f32 %v906, 0.0
    %v935 = vmax.f32 %v907, 0.0
    %v936 = vmax.f32 %v908, 0.0
    %v937 = vmax.f32 %v909, 0.0
    %v938 = vmax.f32 %v910, 0.0
    %v939 = vmax.f32 %v911, 0.0
    %v940 = vmax.f32 %v912, 0.0
    %v941 = vmax.f32 %v913, 0.0
    %v942 = vmax.f32 %v914, 0.0
    %v943 = vmax.f32 %v915, 0.0
    %v944 = vmax.f32 %v916, 0.0
    %v945 = vmax.f32 %v917, 0.0
    %v946 = vmax.f32 %v918, 0.0
    %v947 = vmax.f32 %v919, 0.0
    %v948 = vmax.f32 %v920, 0.0
    %v949 = vmax.f32 %v921, 0.0
    %v950 = vmax.f32 %v922, 0.0
    %v951 = vmax.f32 %v923, 0.0
    %v952 = vmax.f32 %v924, 0.0
    %v953 = vmax.f32 %v925, 0.0
    %v954 = vmax.f32 %v926, 0.0
    %v955 = vmax.f32 %v927, 0.0
    %v956 = vmax.f32 %v928, 0.0
    %v957 = vmax.f32 %v929, 0.0
    %v958 = vmax.f32 %v930, 0.0
    %v959 = vmax.f32 %v931, 0.0
    %v960 = vmax.f32 %v932, 0.0
    %v961 = vmax.f32 %v933, 0.0
    %v962 = vld [vmem:[%s3] sm:$0xf]
    %v963 = vld [vmem:[%s3 + $0x4] sm:$0xf]
    %v964 = vld [vmem:[%s3 + $0x8] sm:$0xf]
    %v965 = vld [vmem:[%s3 + $0xc] sm:$0xf]
    %v966 = vld [vmem:[%s3 + $0x10] sm:$0xf]
    %v967 = vld [vmem:[%s3 + $0x14] sm:$0xf]
    %v968 = vld [vmem:[%s3 + $0x18] sm:$0xf]
    %v969 = vld [vmem:[%s3 + $0x1c] sm:$0xf]
    %v970 = vld [vmem:[%s3 + $0x20] sm:$0xf]
    %v971 = vld [vmem:[%s3 + $0x24] sm:$0xf]
    %v972 = vld [vmem:[%s3 + $0x28] sm:$0xf]
    %v973 = vld [vmem:[%s3 + $0x2c] sm:$0xf]
    %v974 = vld [vmem:[%s3 + $0x30] sm:$0xf]
    %v975 = vld [vmem:[%s3 + $0x34] sm:$0xf]
    %v976 = vld [vmem:[%s3 + $0x38] sm:$0xf]
    %v977 = vld [vmem:[%s3 + $0x3c] sm:$0xf]
    %v978 = vld [vmem:[%s3 + $0x40] sm:$0xf]
    %v979 = vld [vmem:[%s3 + $0x44] sm:$0xf]
    %v980 = vld [vmem:[%s3 + $0x48] sm:$0xf]
    %v981 = vld [vmem:[%s3 + $0x4c] sm:$0xf]
    %v982 = vld [vmem:[%s3 + $0x50] sm:$0xf]
    %v983 = vld [vmem:[%s3 + $0x54] sm:$0xf]
    %v984 = vld [vmem:[%s3 + $0x58] sm:$0xf]
    %v985 = vld [vmem:[%s3 + $0x5c] sm:$0xf]
    %v986 = vld [vmem:[%s3 + $0x60] sm:$0xf]
    %v987 = vld [vmem:[%s3 + $0x64] sm:$0xf]
    %v988 = vld [vmem:[%s3 + $0x68] sm:$0xf]
    %v989 = vld [vmem:[%s3 + $0x6c] sm:$0xf]
    %v990 = vld [vmem:[%s3 + $0x70] sm:$0xf]
    %v991 = vld [vmem:[%s3 + $0x74] sm:$0xf]
    %v992 = vld [vmem:[%s3 + $0x78] sm:$0xf]
    %v993 = vld [vmem:[%s3 + $0x7c] sm:$0xf]
    %v994 = vpack.c.bf16 %v935, %v934
    %v995 = vpack.c.bf16 %v937, %v936
    %v996 = vpack.c.bf16 %v939, %v938
    %v997 = vpack.c.bf16 %v941, %v940
    %v998 = vpack.c.bf16 %v943, %v942
    %v999 = vpack.c.bf16 %v945, %v944
    %v1000 = vpack.c.bf16 %v947, %v946
    %v1001 = vpack.c.bf16 %v949, %v948
    %v1002 = vld [vmem:[%s4] sm:$0xff]
    %v1003 = vld [vmem:[%s4 + $0x8] sm:$0xff]
    %v1004 = vld [vmem:[%s4 + $0x10] sm:$0xff]
    %v1005 = vld [vmem:[%s4 + $0x18] sm:$0xff]
    %v1006 = vld [vmem:[%s4 + $0x20] sm:$0xff]
    %v1007 = vld [vmem:[%s4 + $0x28] sm:$0xff]
    %v1008 = vld [vmem:[%s4 + $0x30] sm:$0xff]
    %v1009 = vld [vmem:[%s4 + $0x38] sm:$0xff]
    %v1010 = vld [vmem:[%s4 + $0x40] sm:$0xff]
    %v1011 = vld [vmem:[%s4 + $0x48] sm:$0xff]
    %v1012 = vld [vmem:[%s4 + $0x50] sm:$0xff]
    %v1013 = vld [vmem:[%s4 + $0x58] sm:$0xff]
    %v1014 = vld [vmem:[%s4 + $0x60] sm:$0xff]
    %v1015 = vld [vmem:[%s4 + $0x68] sm:$0xff]
    %v1016 = vld [vmem:[%s4 + $0x70] sm:$0xff]
    %v1017 = vld [vmem:[%s4 + $0x78] sm:$0xff]
    %v1018 = vld [vmem:[%s4 + $0x80] sm:$0xff]
    %v1019 = vld [vmem:[%s4 + $0x88] sm:$0xff]
    %v1020 = vld [vmem:[%s4 + $0x90] sm:$0xff]
    %v1021 = vld [vmem:[%s4 + $0x98] sm:$0xff]
    %v1022 = vld [vmem:[%s4 + $0xa0] sm:$0xff]
    %v1023 = vld [vmem:[%s4 + $0xa8] sm:$0xff]
    %v1024 = vld [vmem:[%s4 + $0xb0] sm:$0xff]
    %v1025 = vld [vmem:[%s4 + $0xb8] sm:$0xff]
    %v1026 = vld [vmem:[%s4 + $0xc0] sm:$0xff]
    %v1027 = vld [vmem:[%s4 + $0xc8] sm:$0xff]
    %v1028 = vld [vmem:[%s4 + $0xd0] sm:$0xff]
    %v1029 = vld [vmem:[%s4 + $0xd8] sm:$0xff]
    %v1030 = vld [vmem:[%s4 + $0xe0] sm:$0xff]
    %v1031 = vld [vmem:[%s4 + $0xe8] sm:$0xff]
    %v1032 = vld [vmem:[%s4 + $0xf0] sm:$0xff]
    %v1033 = vld [vmem:[%s4 + $0xf8] sm:$0xff]
    %1035 = vset.pattern.permute.xlu0 0
    %1036 = vperm.xlu0 %1035, %v1002
    %v1037 = vpop.permute.xlu0 %1036
    %1040 = vset.pattern.permute.xlu0 0
    %1041 = vperm.xlu0 %1040, %v1003
    %v1042 = vpop.permute.xlu0 %1041
    %1045 = vset.pattern.permute.xlu0 0
    %1046 = vperm.xlu0 %1045, %v1004
    %v1047 = vpop.permute.xlu0 %1046
    %1050 = vset.pattern.permute.xlu0 0
    %1051 = vperm.xlu0 %1050, %v1005
    %v1052 = vpop.permute.xlu0 %1051
    %1055 = vset.pattern.permute.xlu0 0
    %1056 = vperm.xlu0 %1055, %v1006
    %v1057 = vpop.permute.xlu0 %1056
    %1060 = vset.pattern.permute.xlu0 0
    %1061 = vperm.xlu0 %1060, %v1007
    %v1062 = vpop.permute.xlu0 %1061
    %1065 = vset.pattern.permute.xlu0 0
    %1066 = vperm.xlu0 %1065, %v1008
    %v1067 = vpop.permute.xlu0 %1066
    %1070 = vset.pattern.permute.xlu0 0
    %1071 = vperm.xlu0 %1070, %v1009
    %v1072 = vpop.permute.xlu0 %1071
    %1075 = vset.pattern.permute.xlu0 0
    %1076 = vperm.xlu0 %1075, %v1010
    %v1077 = vpop.permute.xlu0 %1076
    %1080 = vset.pattern.permute.xlu0 0
    %1081 = vperm.xlu0 %1080, %v1011
    %v1082 = vpop.permute.xlu0 %1081
    %1085 = vset.pattern.permute.xlu0 0
    %1086 = vperm.xlu0 %1085, %v1012
    %v1087 = vpop.permute.xlu0 %1086
    %1090 = vset.pattern.permute.xlu0 0
    %1091 = vperm.xlu0 %1090, %v1013
    %v1092 = vpop.permute.xlu0 %1091
    %1095 = vset.pattern.permute.xlu0 0
    %1096 = vperm.xlu0 %1095, %v1014
    %v1097 = vpop.permute.xlu0 %1096
    %1100 = vset.pattern.permute.xlu0 0
    %1101 = vperm.xlu0 %1100, %v1015
    %v1102 = vpop.permute.xlu0 %1101
    %1105 = vset.pattern.permute.xlu0 0
    %1106 = vperm.xlu0 %1105, %v1016
    %v1107 = vpop.permute.xlu0 %1106
    %1110 = vset.pattern.permute.xlu0 0
    %1111 = vperm.xlu0 %1110, %v1017
    %v1112 = vpop.permute.xlu0 %1111
    %1115 = vset.pattern.permute.xlu0 0
    %1116 = vperm.xlu0 %1115, %v1018
    %v1117 = vpop.permute.xlu0 %1116
    %1120 = vset.pattern.permute.xlu0 0
    %1121 = vperm.xlu0 %1120, %v1019
    %v1122 = vpop.permute.xlu0 %1121
    %1125 = vset.pattern.permute.xlu0 0
    %1126 = vperm.xlu0 %1125, %v1020
    %v1127 = vpop.permute.xlu0 %1126
    %1130 = vset.pattern.permute.xlu0 0
    %1131 = vperm.xlu0 %1130, %v1021
    %v1132 = vpop.permute.xlu0 %1131
    %1135 = vset.pattern.permute.xlu0 0
    %1136 = vperm.xlu0 %1135, %v1022
    %v1137 = vpop.permute.xlu0 %1136
    %1140 = vset.pattern.permute.xlu0 0
    %1141 = vperm.xlu0 %1140, %v1023
    %v1142 = vpop.permute.xlu0 %1141
    %1145 = vset.pattern.permute.xlu0 0
    %1146 = vperm.xlu0 %1145, %v1024
    %v1147 = vpop.permute.xlu0 %1146
    %1150 = vset.pattern.permute.xlu0 0
    %1151 = vperm.xlu0 %1150, %v1025
    %v1152 = vpop.permute.xlu0 %1151
    %1155 = vset.pattern.permute.xlu0 0
    %1156 = vperm.xlu0 %1155, %v1026
    %v1157 = vpop.permute.xlu0 %1156
    %1160 = vset.pattern.permute.xlu0 0
    %1161 = vperm.xlu0 %1160, %v1027
    %v1162 = vpop.permute.xlu0 %1161
    %1165 = vset.pattern.permute.xlu0 0
    %1166 = vperm.xlu0 %1165, %v1028
    %v1167 = vpop.permute.xlu0 %1166
    %1170 = vset.pattern.permute.xlu0 0
    %1171 = vperm.xlu0 %1170, %v1029
    %v1172 = vpop.permute.xlu0 %1171
    %1175 = vset.pattern.permute.xlu0 0
    %1176 = vperm.xlu0 %1175, %v1030
    %v1177 = vpop.permute.xlu0 %1176
    %1180 = vset.pattern.permute.xlu0 0
    %1181 = vperm.xlu0 %1180, %v1031
    %v1182 = vpop.permute.xlu0 %1181
    %1185 = vset.pattern.permute.xlu0 0
    %1186 = vperm.xlu0 %1185, %v1032
    %v1187 = vpop.permute.xlu0 %1186
    %1190 = vset.pattern.permute.xlu0 0
    %1191 = vperm.xlu0 %1190, %v1033
    %v1192 = vpop.permute.xlu0 %1191
    %v1226 = vunpack.c.l.b16 %v962
    %v1227 = vunpack.c.l.b16 %v963
    %v1228 = vunpack.c.l.b16 %v964
    %v1229 = vunpack.c.l.b16 %v965
    %v1230 = vunpack.c.l.b16 %v966
    %v1231 = vunpack.c.l.b16 %v967
    %v1232 = vunpack.c.l.b16 %v968
    %v1233 = vunpack.c.l.b16 %v969
    %v1234 = vunpack.c.l.b16 %v970
    %v1235 = vunpack.c.l.b16 %v971
    %v1236 = vunpack.c.l.b16 %v972
    %v1237 = vunpack.c.l.b16 %v973
    %v1238 = vunpack.c.l.b16 %v974
    %v1239 = vunpack.c.l.b16 %v975
    %v1240 = vunpack.c.l.b16 %v976
    %v1241 = vunpack.c.l.b16 %v977
    %v1242 = vunpack.c.l.b16 %v978
    %v1243 = vunpack.c.l.b16 %v979
    %v1244 = vunpack.c.l.b16 %v980
    %v1245 = vunpack.c.l.b16 %v981
    %v1246 = vunpack.c.l.b16 %v982
    %v1247 = vunpack.c.l.b16 %v983
    %v1248 = vunpack.c.l.b16 %v984
    %v1249 = vunpack.c.l.b16 %v985
    %v1250 = vunpack.c.l.b16 %v986
    %v1251 = vunpack.c.l.b16 %v987
    %v1252 = vunpack.c.l.b16 %v988
    %v1253 = vunpack.c.l.b16 %v989
    %v1254 = vunpack.c.l.b16 %v990
    %v1255 = vunpack.c.l.b16 %v991
    %v1256 = vunpack.c.l.b16 %v992
    %v1257 = vunpack.c.l.b16 %v993
    %v1258 = vpack.c.b16 %v1227, %v1226
    %v1259 = vpack.c.b16 %v1229, %v1228
    %v1260 = vpack.c.b16 %v1231, %v1230
    %v1261 = vpack.c.b16 %v1233, %v1232
    %v1262 = vpack.c.b16 %v1235, %v1234
    %v1263 = vpack.c.b16 %v1237, %v1236
    %v1264 = vpack.c.b16 %v1239, %v1238
    %v1265 = vpack.c.b16 %v1241, %v1240
    %v1266 = vpack.c.b16 %v1243, %v1242
    %v1267 = vpack.c.b16 %v1245, %v1244
    %v1268 = vpack.c.b16 %v1247, %v1246
    %v1269 = vpack.c.b16 %v1249, %v1248
    %v1270 = vpack.c.b16 %v1251, %v1250
    %v1271 = vpack.c.b16 %v1253, %v1252
    %v1272 = vpack.c.b16 %v1255, %v1254
    %v1273 = vpack.c.b16 %v1257, %v1256
    %1290 = vmatpush.bf16.msra.mxu0 %v1001
    %1291 = vmatpush.bf16.msra.mxu0 %v1000
    %1292 = vmatpush.bf16.msra.mxu0 %v999
    %1293 = vmatpush.bf16.msra.mxu0 %v998
    %1294 = vmatpush.bf16.msra.mxu0 %v997
    %1295 = vmatpush.bf16.msra.mxu0 %v996
    %1296 = vmatpush.bf16.msra.mxu0 %v995
    %1297 = vmatpush.bf16.msra.mxu0 %v994
    %1298 = vmatmul.bf16.gmra.mxu0 %v1258
    %v1299 = vpop.f32.mrf.mxu0
    %v1300 = vadd.f32 %v1037, %v1299
    %v1301 = vpop.f32.mrf.mxu0
    %v1302 = vadd.f32 %v1042, %v1301
    %1303 = vmatmul.bf16.gmra.mxu0 %v1259
    %v1304 = vpop.f32.mrf.mxu0
    %v1305 = vadd.f32 %v1047, %v1304
    %v1306 = vpop.f32.mrf.mxu0
    %v1307 = vadd.f32 %v1052, %v1306
    %1308 = vmatmul.bf16.gmra.mxu0 %v1260
    %v1309 = vpop.f32.mrf.mxu0
    %v1310 = vadd.f32 %v1057, %v1309
    %v1311 = vpop.f32.mrf.mxu0
    %v1312 = vadd.f32 %v1062, %v1311
    %1313 = vmatmul.bf16.gmra.mxu0 %v1261
    %v1314 = vpop.f32.mrf.mxu0
    %v1315 = vadd.f32 %v1067, %v1314
    %v1316 = vpop.f32.mrf.mxu0
    %v1317 = vadd.f32 %v1072, %v1316
    %1318 = vmatmul.bf16.gmra.mxu0 %v1262
    %v1319 = vpop.f32.mrf.mxu0
    %v1320 = vadd.f32 %v1077, %v1319
    %v1321 = vpop.f32.mrf.mxu0
    %v1322 = vadd.f32 %v1082, %v1321
    %1323 = vmatmul.bf16.gmra.mxu0 %v1263
    %v1324 = vpop.f32.mrf.mxu0
    %v1325 = vadd.f32 %v1087, %v1324
    %v1326 = vpop.f32.mrf.mxu0
    %v1327 = vadd.f32 %v1092, %v1326
    %1328 = vmatmul.bf16.gmra.mxu0 %v1264
    %v1329 = vpop.f32.mrf.mxu0
    %v1330 = vadd.f32 %v1097, %v1329
    %v1331 = vpop.f32.mrf.mxu0
    %v1332 = vadd.f32 %v1102, %v1331
    %1333 = vmatmul.bf16.gmra.mxu0 %v1265
    %v1334 = vpop.f32.mrf.mxu0
    %v1335 = vadd.f32 %v1107, %v1334
    %v1336 = vpop.f32.mrf.mxu0
    %v1337 = vadd.f32 %v1112, %v1336
    %1338 = vmatmul.bf16.gmra.mxu0 %v1266
    %v1339 = vpop.f32.mrf.mxu0
    %v1340 = vadd.f32 %v1117, %v1339
    %v1341 = vpop.f32.mrf.mxu0
    %v1342 = vadd.f32 %v1122, %v1341
    %1343 = vmatmul.bf16.gmra.mxu0 %v1267
    %v1344 = vpop.f32.mrf.mxu0
    %v1345 = vadd.f32 %v1127, %v1344
    %v1346 = vpop.f32.mrf.mxu0
    %v1347 = vadd.f32 %v1132, %v1346
    %1348 = vmatmul.bf16.gmra.mxu0 %v1268
    %v1349 = vpop.f32.mrf.mxu0
    %v1350 = vadd.f32 %v1137, %v1349
    %v1351 = vpop.f32.mrf.mxu0
    %v1352 = vadd.f32 %v1142, %v1351
    %1353 = vmatmul.bf16.gmra.mxu0 %v1269
    %v1354 = vpop.f32.mrf.mxu0
    %v1355 = vadd.f32 %v1147, %v1354
    %v1356 = vpop.f32.mrf.mxu0
    %v1357 = vadd.f32 %v1152, %v1356
    %1358 = vmatmul.bf16.gmra.mxu0 %v1270
    %v1359 = vpop.f32.mrf.mxu0
    %v1360 = vadd.f32 %v1157, %v1359
    %v1361 = vpop.f32.mrf.mxu0
    %v1362 = vadd.f32 %v1162, %v1361
    %1363 = vmatmul.bf16.gmra.mxu0 %v1271
    %v1364 = vpop.f32.mrf.mxu0
    %v1365 = vadd.f32 %v1167, %v1364
    %v1366 = vpop.f32.mrf.mxu0
    %v1367 = vadd.f32 %v1172, %v1366
    %1368 = vmatmul.bf16.gmra.mxu0 %v1272
    %v1369 = vpop.f32.mrf.mxu0
    %v1370 = vadd.f32 %v1177, %v1369
    %v1371 = vpop.f32.mrf.mxu0
    %v1372 = vadd.f32 %v1182, %v1371
    %1373 = vmatmul.bf16.gmra.mxu0 %v1273
    %v1374 = vpop.f32.mrf.mxu0
    %v1375 = vadd.f32 %v1187, %v1374
    %v1376 = vpop.f32.mrf.mxu0
    %v1377 = vadd.f32 %v1192, %v1376
    %1378 = vdwg.mxu0
    %vm1379 = vcmp.gt.f32.partialorder %v1300, 0.0
    %vm1380 = vcmp.gt.f32.partialorder %v1302, 0.0
    %vm1381 = vcmp.gt.f32.partialorder %v1305, 0.0
    %vm1382 = vcmp.gt.f32.partialorder %v1307, 0.0
    %vm1383 = vcmp.gt.f32.partialorder %v1310, 0.0
    %vm1384 = vcmp.gt.f32.partialorder %v1312, 0.0
    %vm1385 = vcmp.gt.f32.partialorder %v1315, 0.0
    %vm1386 = vcmp.gt.f32.partialorder %v1317, 0.0
    %vm1387 = vcmp.gt.f32.partialorder %v1320, 0.0
    %vm1388 = vcmp.gt.f32.partialorder %v1322, 0.0
    %vm1389 = vcmp.gt.f32.partialorder %v1325, 0.0
    %vm1390 = vcmp.gt.f32.partialorder %v1327, 0.0
    %vm1391 = vcmp.gt.f32.partialorder %v1330, 0.0
    %vm1392 = vcmp.gt.f32.partialorder %v1332, 0.0
    %vm1393 = vcmp.gt.f32.partialorder %v1335, 0.0
    %vm1394 = vcmp.gt.f32.partialorder %v1337, 0.0
    %vm1395 = vcmp.gt.f32.partialorder %v1340, 0.0
    %vm1396 = vcmp.gt.f32.partialorder %v1342, 0.0
    %vm1397 = vcmp.gt.f32.partialorder %v1345, 0.0
    %vm1398 = vcmp.gt.f32.partialorder %v1347, 0.0
    %vm1399 = vcmp.gt.f32.partialorder %v1350, 0.0
    %vm1400 = vcmp.gt.f32.partialorder %v1352, 0.0
    %vm1401 = vcmp.gt.f32.partialorder %v1355, 0.0
    %vm1402 = vcmp.gt.f32.partialorder %v1357, 0.0
    %vm1403 = vcmp.gt.f32.partialorder %v1360, 0.0
    %vm1404 = vcmp.gt.f32.partialorder %v1362, 0.0
    %vm1405 = vcmp.gt.f32.partialorder %v1365, 0.0
    %vm1406 = vcmp.gt.f32.partialorder %v1367, 0.0
    %vm1407 = vcmp.gt.f32.partialorder %v1370, 0.0
    %vm1408 = vcmp.gt.f32.partialorder %v1372, 0.0
    %vm1409 = vcmp.gt.f32.partialorder %v1375, 0.0
    %vm1410 = vcmp.gt.f32.partialorder %v1377, 0.0
    %v1411 = vmul.f32 %v1300, 0.01
    %v1412 = vmul.f32 %v1302, 0.01
    %v1413 = vmul.f32 %v1305, 0.01
    %v1414 = vmul.f32 %v1307, 0.01
    %v1415 = vmul.f32 %v1310, 0.01
    %v1416 = vmul.f32 %v1312, 0.01
    %v1417 = vmul.f32 %v1315, 0.01
    %v1418 = vmul.f32 %v1317, 0.01
    %v1419 = vmul.f32 %v1320, 0.01
    %v1420 = vmul.f32 %v1322, 0.01
    %v1421 = vmul.f32 %v1325, 0.01
    %v1422 = vmul.f32 %v1327, 0.01
    %v1423 = vmul.f32 %v1330, 0.01
    %v1424 = vmul.f32 %v1332, 0.01
    %v1425 = vmul.f32 %v1335, 0.01
    %v1426 = vmul.f32 %v1337, 0.01
    %v1427 = vmul.f32 %v1340, 0.01
    %v1428 = vmul.f32 %v1342, 0.01
    %v1429 = vmul.f32 %v1345, 0.01
    %v1430 = vmul.f32 %v1347, 0.01
    %v1431 = vmul.f32 %v1350, 0.01
    %v1432 = vmul.f32 %v1352, 0.01
    %v1433 = vmul.f32 %v1355, 0.01
    %v1434 = vmul.f32 %v1357, 0.01
    %v1435 = vmul.f32 %v1360, 0.01
    %v1436 = vmul.f32 %v1362, 0.01
    %v1437 = vmul.f32 %v1365, 0.01
    %v1438 = vmul.f32 %v1367, 0.01
    %v1439 = vmul.f32 %v1370, 0.01
    %v1440 = vmul.f32 %v1372, 0.01
    %v1441 = vmul.f32 %v1375, 0.01
    %v1442 = vmul.f32 %v1377, 0.01
    %v1443 = vsel %vm1379, %v1300, %v1411
    %v1444 = vsel %vm1380, %v1302, %v1412
    %v1445 = vsel %vm1381, %v1305, %v1413
    %v1446 = vsel %vm1382, %v1307, %v1414
    %v1447 = vsel %vm1383, %v1310, %v1415
    %v1448 = vsel %vm1384, %v1312, %v1416
    %v1449 = vsel %vm1385, %v1315, %v1417
    %v1450 = vsel %vm1386, %v1317, %v1418
    %v1451 = vsel %vm1387, %v1320, %v1419
    %v1452 = vsel %vm1388, %v1322, %v1420
    %v1453 = vsel %vm1389, %v1325, %v1421
    %v1454 = vsel %vm1390, %v1327, %v1422
    %v1455 = vsel %vm1391, %v1330, %v1423
    %v1456 = vsel %vm1392, %v1332, %v1424
    %v1457 = vsel %vm1393, %v1335, %v1425
    %v1458 = vsel %vm1394, %v1337, %v1426
    %v1459 = vsel %vm1395, %v1340, %v1427
    %v1460 = vsel %vm1396, %v1342, %v1428
    %v1461 = vsel %vm1397, %v1345, %v1429
    %v1462 = vsel %vm1398, %v1347, %v1430
    %v1463 = vsel %vm1399, %v1350, %v1431
    %v1464 = vsel %vm1400, %v1352, %v1432
    %v1465 = vsel %vm1401, %v1355, %v1433
    %v1466 = vsel %vm1402, %v1357, %v1434
    %v1467 = vsel %vm1403, %v1360, %v1435
    %v1468 = vsel %vm1404, %v1362, %v1436
    %v1469 = vsel %vm1405, %v1365, %v1437
    %v1470 = vsel %vm1406, %v1367, %v1438
    %v1471 = vsel %vm1407, %v1370, %v1439
    %v1472 = vsel %vm1408, %v1372, %v1440
    %v1473 = vsel %vm1409, %v1375, %v1441
    %v1474 = vsel %vm1410, %v1377, %v1442
    %v1475 = vld [vmem:[%s5] sm:$0xff]
    %v1476 = vld [vmem:[%s5 + $0x8] sm:$0xff]
    %v1477 = vld [vmem:[%s5 + $0x10] sm:$0xff]
    %v1478 = vld [vmem:[%s5 + $0x18] sm:$0xff]
    %v1479 = vld [vmem:[%s5 + $0x20] sm:$0xff]
    %v1480 = vld [vmem:[%s5 + $0x28] sm:$0xff]
    %v1481 = vld [vmem:[%s5 + $0x30] sm:$0xff]
    %v1482 = vld [vmem:[%s5 + $0x38] sm:$0xff]
    %v1483 = vld [vmem:[%s5 + $0x40] sm:$0xff]
    %v1484 = vld [vmem:[%s5 + $0x48] sm:$0xff]
    %v1485 = vld [vmem:[%s5 + $0x50] sm:$0xff]
    %v1486 = vld [vmem:[%s5 + $0x58] sm:$0xff]
    %v1487 = vld [vmem:[%s5 + $0x60] sm:$0xff]
    %v1488 = vld [vmem:[%s5 + $0x68] sm:$0xff]
    %v1489 = vld [vmem:[%s5 + $0x70] sm:$0xff]
    %v1490 = vld [vmem:[%s5 + $0x78] sm:$0xff]
    %v1491 = vpack.c.bf16 %v1444, %v1443
    %v1492 = vpack.c.bf16 %v1446, %v1445
    %v1493 = vpack.c.bf16 %v1448, %v1447
    %v1494 = vpack.c.bf16 %v1450, %v1449
    %v1495 = vpack.c.bf16 %v1452, %v1451
    %v1496 = vpack.c.bf16 %v1454, %v1453
    %v1497 = vpack.c.bf16 %v1456, %v1455
    %v1498 = vpack.c.bf16 %v1458, %v1457
    %v1499 = vpack.c.bf16 %v1460, %v1459
    %v1500 = vpack.c.bf16 %v1462, %v1461
    %v1501 = vpack.c.bf16 %v1464, %v1463
    %v1502 = vpack.c.bf16 %v1466, %v1465
    %v1503 = vpack.c.bf16 %v1468, %v1467
    %v1504 = vpack.c.bf16 %v1470, %v1469
    %v1505 = vpack.c.bf16 %v1472, %v1471
    %v1506 = vpack.c.bf16 %v1474, %v1473
    %v1507 = vld [vmem:[%s6] sm:$0xff]
    %v1508 = vld [vmem:[%s6 + $0x8] sm:$0xff]
    %v1509 = vld [vmem:[%s6 + $0x10] sm:$0xff]
    %v1510 = vld [vmem:[%s6 + $0x18] sm:$0xff]
    %v1511 = vld [vmem:[%s6 + $0x20] sm:$0xff]
    %v1512 = vld [vmem:[%s6 + $0x28] sm:$0xff]
    %v1513 = vld [vmem:[%s6 + $0x30] sm:$0xff]
    %v1514 = vld [vmem:[%s6 + $0x38] sm:$0xff]
    %v1515 = vld [vmem:[%s6 + $0x40] sm:$0xff]
    %v1516 = vld [vmem:[%s6 + $0x48] sm:$0xff]
    %v1517 = vld [vmem:[%s6 + $0x50] sm:$0xff]
    %v1518 = vld [vmem:[%s6 + $0x58] sm:$0xff]
    %v1519 = vld [vmem:[%s6 + $0x60] sm:$0xff]
    %v1520 = vld [vmem:[%s6 + $0x68] sm:$0xff]
    %v1521 = vld [vmem:[%s6 + $0x70] sm:$0xff]
    %v1522 = vld [vmem:[%s6 + $0x78] sm:$0xff]
    %1524 = vset.pattern.permute.xlu0 0
    %1525 = vperm.xlu0 %1524, %v1507
    %v1526 = vpop.permute.xlu0 %1525
    %1529 = vset.pattern.permute.xlu0 0
    %1530 = vperm.xlu0 %1529, %v1508
    %v1531 = vpop.permute.xlu0 %1530
    %1534 = vset.pattern.permute.xlu0 0
    %1535 = vperm.xlu0 %1534, %v1509
    %v1536 = vpop.permute.xlu0 %1535
    %1539 = vset.pattern.permute.xlu0 0
    %1540 = vperm.xlu0 %1539, %v1510
    %v1541 = vpop.permute.xlu0 %1540
    %1544 = vset.pattern.permute.xlu0 0
    %1545 = vperm.xlu0 %1544, %v1511
    %v1546 = vpop.permute.xlu0 %1545
    %1549 = vset.pattern.permute.xlu0 0
    %1550 = vperm.xlu0 %1549, %v1512
    %v1551 = vpop.permute.xlu0 %1550
    %1554 = vset.pattern.permute.xlu0 0
    %1555 = vperm.xlu0 %1554, %v1513
    %v1556 = vpop.permute.xlu0 %1555
    %1559 = vset.pattern.permute.xlu0 0
    %1560 = vperm.xlu0 %1559, %v1514
    %v1561 = vpop.permute.xlu0 %1560
    %1564 = vset.pattern.permute.xlu0 0
    %1565 = vperm.xlu0 %1564, %v1515
    %v1566 = vpop.permute.xlu0 %1565
    %1569 = vset.pattern.permute.xlu0 0
    %1570 = vperm.xlu0 %1569, %v1516
    %v1571 = vpop.permute.xlu0 %1570
    %1574 = vset.pattern.permute.xlu0 0
    %1575 = vperm.xlu0 %1574, %v1517
    %v1576 = vpop.permute.xlu0 %1575
    %1579 = vset.pattern.permute.xlu0 0
    %1580 = vperm.xlu0 %1579, %v1518
    %v1581 = vpop.permute.xlu0 %1580
    %1584 = vset.pattern.permute.xlu0 0
    %1585 = vperm.xlu0 %1584, %v1519
    %v1586 = vpop.permute.xlu0 %1585
    %1589 = vset.pattern.permute.xlu0 0
    %1590 = vperm.xlu0 %1589, %v1520
    %v1591 = vpop.permute.xlu0 %1590
    %1594 = vset.pattern.permute.xlu0 0
    %1595 = vperm.xlu0 %1594, %v1521
    %v1596 = vpop.permute.xlu0 %1595
    %1599 = vset.pattern.permute.xlu0 0
    %1600 = vperm.xlu0 %1599, %v1522
    %v1601 = vpop.permute.xlu0 %1600
    %v1619 = vunpack.c.l.b16 %v1475
    %v1620 = vunpack.c.h.b16 %v1475
    %v1621 = vunpack.c.l.b16 %v1476
    %v1622 = vunpack.c.h.b16 %v1476
    %v1623 = vunpack.c.l.b16 %v1477
    %v1624 = vunpack.c.h.b16 %v1477
    %v1625 = vunpack.c.l.b16 %v1478
    %v1626 = vunpack.c.h.b16 %v1478
    %v1627 = vunpack.c.l.b16 %v1479
    %v1628 = vunpack.c.h.b16 %v1479
    %v1629 = vunpack.c.l.b16 %v1480
    %v1630 = vunpack.c.h.b16 %v1480
    %v1631 = vunpack.c.l.b16 %v1481
    %v1632 = vunpack.c.h.b16 %v1481
    %v1633 = vunpack.c.l.b16 %v1482
    %v1634 = vunpack.c.h.b16 %v1482
    %v1635 = vunpack.c.l.b16 %v1483
    %v1636 = vunpack.c.h.b16 %v1483
    %v1637 = vunpack.c.l.b16 %v1484
    %v1638 = vunpack.c.h.b16 %v1484
    %v1639 = vunpack.c.l.b16 %v1485
    %v1640 = vunpack.c.h.b16 %v1485
    %v1641 = vunpack.c.l.b16 %v1486
    %v1642 = vunpack.c.h.b16 %v1486
    %v1643 = vunpack.c.l.b16 %v1487
    %v1644 = vunpack.c.h.b16 %v1487
    %v1645 = vunpack.c.l.b16 %v1488
    %v1646 = vunpack.c.h.b16 %v1488
    %v1647 = vunpack.c.l.b16 %v1489
    %v1648 = vunpack.c.h.b16 %v1489
    %v1649 = vunpack.c.l.b16 %v1490
    %v1650 = vunpack.c.h.b16 %v1490
    %v1651 = vpack.c.b16 %v1621, %v1619
    %v1652 = vpack.c.b16 %v1622, %v1620
    %v1653 = vpack.c.b16 %v1625, %v1623
    %v1654 = vpack.c.b16 %v1626, %v1624
    %v1655 = vpack.c.b16 %v1629, %v1627
    %v1656 = vpack.c.b16 %v1630, %v1628
    %v1657 = vpack.c.b16 %v1633, %v1631
    %v1658 = vpack.c.b16 %v1634, %v1632
    %v1659 = vpack.c.b16 %v1637, %v1635
    %v1660 = vpack.c.b16 %v1638, %v1636
    %v1661 = vpack.c.b16 %v1641, %v1639
    %v1662 = vpack.c.b16 %v1642, %v1640
    %v1663 = vpack.c.b16 %v1645, %v1643
    %v1664 = vpack.c.b16 %v1646, %v1644
    %v1665 = vpack.c.b16 %v1649, %v1647
    %v1666 = vpack.c.b16 %v1650, %v1648
    %1683 = vmatpush.bf16.msra.mxu0 %v1498
    %1684 = vmatpush.bf16.msra.mxu0 %v1497
    %1685 = vmatpush.bf16.msra.mxu0 %v1496
    %1686 = vmatpush.bf16.msra.mxu0 %v1495
    %1687 = vmatpush.bf16.msra.mxu0 %v1494
    %1688 = vmatpush.bf16.msra.mxu0 %v1493
    %1689 = vmatpush.bf16.msra.mxu0 %v1492
    %1690 = vmatpush.bf16.msra.mxu0 %v1491
    %1691 = vmatmul.bf16.gmra.mxu0 %v1651
    %v1692 = vpop.f32.mrf.mxu0
    %v1693 = vadd.f32 %v1526, %v1692
    %v1694 = vpop.f32.mrf.mxu0
    %v1695 = vadd.f32 %v1531, %v1694
    %1696 = vmatmul.bf16.gmra.mxu0 %v1653
    %v1697 = vpop.f32.mrf.mxu0
    %v1698 = vadd.f32 %v1536, %v1697
    %v1699 = vpop.f32.mrf.mxu0
    %v1700 = vadd.f32 %v1541, %v1699
    %1701 = vmatmul.bf16.gmra.mxu0 %v1655
    %v1702 = vpop.f32.mrf.mxu0
    %v1703 = vadd.f32 %v1546, %v1702
    %v1704 = vpop.f32.mrf.mxu0
    %v1705 = vadd.f32 %v1551, %v1704
    %1706 = vmatmul.bf16.gmra.mxu0 %v1657
    %v1707 = vpop.f32.mrf.mxu0
    %v1708 = vadd.f32 %v1556, %v1707
    %v1709 = vpop.f32.mrf.mxu0
    %v1710 = vadd.f32 %v1561, %v1709
    %1711 = vmatmul.bf16.gmra.mxu0 %v1659
    %v1712 = vpop.f32.mrf.mxu0
    %v1713 = vadd.f32 %v1566, %v1712
    %v1714 = vpop.f32.mrf.mxu0
    %v1715 = vadd.f32 %v1571, %v1714
    %1716 = vmatmul.bf16.gmra.mxu0 %v1661
    %v1717 = vpop.f32.mrf.mxu0
    %v1718 = vadd.f32 %v1576, %v1717
    %v1719 = vpop.f32.mrf.mxu0
    %v1720 = vadd.f32 %v1581, %v1719
    %1721 = vmatmul.bf16.gmra.mxu0 %v1663
    %v1722 = vpop.f32.mrf.mxu0
    %v1723 = vadd.f32 %v1586, %v1722
    %v1724 = vpop.f32.mrf.mxu0
    %v1725 = vadd.f32 %v1591, %v1724
    %1726 = vmatmul.bf16.gmra.mxu0 %v1665
    %v1727 = vpop.f32.mrf.mxu0
    %v1728 = vadd.f32 %v1596, %v1727
    %v1729 = vpop.f32.mrf.mxu0
    %v1730 = vadd.f32 %v1601, %v1729
    %1731 = vdwg.mxu0
    %1732 = vmatpush.bf16.msra.mxu0 %v1506
    %1733 = vmatpush.bf16.msra.mxu0 %v1505
    %1734 = vmatpush.bf16.msra.mxu0 %v1504
    %1735 = vmatpush.bf16.msra.mxu0 %v1503
    %1736 = vmatpush.bf16.msra.mxu0 %v1502
    %1737 = vmatpush.bf16.msra.mxu0 %v1501
    %1738 = vmatpush.bf16.msra.mxu0 %v1500
    %1739 = vmatpush.bf16.msra.mxu0 %v1499
    %1740 = vmatmul.bf16.gmra.mxu0 %v1652
    %v1741 = vpop.f32.mrf.mxu0
    %v1742 = vadd.f32 %v1693, %v1741
    %v1743 = vpop.f32.mrf.mxu0
    %v1744 = vadd.f32 %v1695, %v1743
    %1745 = vmatmul.bf16.gmra.mxu0 %v1654
    %v1746 = vpop.f32.mrf.mxu0
    %v1747 = vadd.f32 %v1698, %v1746
    %v1748 = vpop.f32.mrf.mxu0
    %v1749 = vadd.f32 %v1700, %v1748
    %1750 = vmatmul.bf16.gmra.mxu0 %v1656
    %v1751 = vpop.f32.mrf.mxu0
    %v1752 = vadd.f32 %v1703, %v1751
    %v1753 = vpop.f32.mrf.mxu0
    %v1754 = vadd.f32 %v1705, %v1753
    %1755 = vmatmul.bf16.gmra.mxu0 %v1658
    %v1756 = vpop.f32.mrf.mxu0
    %v1757 = vadd.f32 %v1708, %v1756
    %v1758 = vpop.f32.mrf.mxu0
    %v1759 = vadd.f32 %v1710, %v1758
    %1760 = vmatmul.bf16.gmra.mxu0 %v1660
    %v1761 = vpop.f32.mrf.mxu0
    %v1762 = vadd.f32 %v1713, %v1761
    %v1763 = vpop.f32.mrf.mxu0
    %v1764 = vadd.f32 %v1715, %v1763
    %1765 = vmatmul.bf16.gmra.mxu0 %v1662
    %v1766 = vpop.f32.mrf.mxu0
    %v1767 = vadd.f32 %v1718, %v1766
    %v1768 = vpop.f32.mrf.mxu0
    %v1769 = vadd.f32 %v1720, %v1768
    %1770 = vmatmul.bf16.gmra.mxu0 %v1664
    %v1771 = vpop.f32.mrf.mxu0
    %v1772 = vadd.f32 %v1723, %v1771
    %v1773 = vpop.f32.mrf.mxu0
    %v1774 = vadd.f32 %v1725, %v1773
    %1775 = vmatmul.bf16.gmra.mxu0 %v1666
    %v1776 = vpop.f32.mrf.mxu0
    %v1777 = vadd.f32 %v1728, %v1776
    %v1778 = vpop.f32.mrf.mxu0
    %v1779 = vadd.f32 %v1730, %v1778
    %1780 = vdwg.mxu0
    %vm1781 = vcmp.gt.f32.partialorder %v1742, 0.0
    %vm1782 = vcmp.gt.f32.partialorder %v1744, 0.0
    %vm1783 = vcmp.gt.f32.partialorder %v1747, 0.0
    %vm1784 = vcmp.gt.f32.partialorder %v1749, 0.0
    %vm1785 = vcmp.gt.f32.partialorder %v1752, 0.0
    %vm1786 = vcmp.gt.f32.partialorder %v1754, 0.0
    %vm1787 = vcmp.gt.f32.partialorder %v1757, 0.0
    %vm1788 = vcmp.gt.f32.partialorder %v1759, 0.0
    %vm1789 = vcmp.gt.f32.partialorder %v1762, 0.0
    %vm1790 = vcmp.gt.f32.partialorder %v1764, 0.0
    %vm1791 = vcmp.gt.f32.partialorder %v1767, 0.0
    %vm1792 = vcmp.gt.f32.partialorder %v1769, 0.0
    %vm1793 = vcmp.gt.f32.partialorder %v1772, 0.0
    %vm1794 = vcmp.gt.f32.partialorder %v1774, 0.0
    %vm1795 = vcmp.gt.f32.partialorder %v1777, 0.0
    %vm1796 = vcmp.gt.f32.partialorder %v1779, 0.0
    %v1797 = vmul.f32 %v1742, 0.01
    %v1798 = vmul.f32 %v1744, 0.01
    %v1799 = vmul.f32 %v1747, 0.01
    %v1800 = vmul.f32 %v1749, 0.01
    %v1801 = vmul.f32 %v1752, 0.01
    %v1802 = vmul.f32 %v1754, 0.01
    %v1803 = vmul.f32 %v1757, 0.01
    %v1804 = vmul.f32 %v1759, 0.01
    %v1805 = vmul.f32 %v1762, 0.01
    %v1806 = vmul.f32 %v1764, 0.01
    %v1807 = vmul.f32 %v1767, 0.01
    %v1808 = vmul.f32 %v1769, 0.01
    %v1809 = vmul.f32 %v1772, 0.01
    %v1810 = vmul.f32 %v1774, 0.01
    %v1811 = vmul.f32 %v1777, 0.01
    %v1812 = vmul.f32 %v1779, 0.01
    %v1813 = vsel %vm1781, %v1742, %v1797
    %v1814 = vsel %vm1782, %v1744, %v1798
    %v1815 = vsel %vm1783, %v1747, %v1799
    %v1816 = vsel %vm1784, %v1749, %v1800
    %v1817 = vsel %vm1785, %v1752, %v1801
    %v1818 = vsel %vm1786, %v1754, %v1802
    %v1819 = vsel %vm1787, %v1757, %v1803
    %v1820 = vsel %vm1788, %v1759, %v1804
    %v1821 = vsel %vm1789, %v1762, %v1805
    %v1822 = vsel %vm1790, %v1764, %v1806
    %v1823 = vsel %vm1791, %v1767, %v1807
    %v1824 = vsel %vm1792, %v1769, %v1808
    %v1825 = vsel %vm1793, %v1772, %v1809
    %v1826 = vsel %vm1794, %v1774, %v1810
    %v1827 = vsel %vm1795, %v1777, %v1811
    %v1828 = vsel %vm1796, %v1779, %v1812
    %v1829 = vld [vmem:[%s7] sm:$0xff]
    %v1830 = vld [vmem:[%s7 + $0x8] sm:$0xff]
    %v1831 = vld [vmem:[%s7 + $0x10] sm:$0xf]
    %v1832 = vld [vmem:[%s7 + $0x18] sm:$0xf]
    %v1833 = vld [vmem:[%s8] sm:$0xff]
    %v1834 = vld [vmem:[%s8 + $0x8] sm:$0xf]
    %1836 = vset.pattern.permute.xlu0 0
    %1837 = vperm.xlu0 %1836, %v1833
    %v1838 = vpop.permute.xlu0 %1837
    %1841 = vset.pattern.permute.xlu0 0
    %1842 = vperm.xlu0 %1841, %v1834
    %v1843 = vpop.permute.xlu0 %1842
    %vm1845 = vcmask 785408
    %v1847 = vsel %vm1845, %v1830, 0
    %v1850 = vsel %vm1845, %v1832, 0
    %1852 = vmatpush.msra.mxu0 %v1828
    %1853 = vmatpush.msra.mxu0 %v1827
    %1854 = vmatpush.msra.mxu0 %v1826
    %1855 = vmatpush.msra.mxu0 %v1825
    %1856 = vmatpush.msra.mxu0 %v1824
    %1857 = vmatpush.msra.mxu0 %v1823
    %1858 = vmatpush.msra.mxu0 %v1822
    %1859 = vmatpush.msra.mxu0 %v1821
    %1860 = vmatpush.msra.mxu0 %v1820
    %1861 = vmatpush.msra.mxu0 %v1819
    %1862 = vmatpush.msra.mxu0 %v1818
    %1863 = vmatpush.msra.mxu0 %v1817
    %1864 = vmatpush.msra.mxu0 %v1816
    %1865 = vmatpush.msra.mxu0 %v1815
    %1866 = vmatpush.msra.mxu0 %v1814
    %1867 = vmatpush.msra.mxu0 %v1813
    %1868 = vmatmul.f32.gmra.mxu0 %v1829
    %v1869 = vpop.f32.mrf.mxu0
    %v1870 = vadd.f32 %v1838, %v1869
    %1871 = vmatmul.f32.gmra.mxu0 %v1831
    %v1872 = vpop.f32.mrf.mxu0
    %v1873 = vadd.f32 %v1843, %v1872
    %1874 = vdwg.mxu0
    %1875 = vmatpush.msra.mxu0 0.0
    %1876 = vmatpush.msra.mxu0 0.0
    %1877 = vmatpush.msra.mxu0 0.0
    %1878 = vmatpush.msra.mxu0 0.0
    %1879 = vmatpush.msra.mxu0 %v961
    %1880 = vmatpush.msra.mxu0 %v960
    %1881 = vmatpush.msra.mxu0 %v959
    %1882 = vmatpush.msra.mxu0 %v958
    %1883 = vmatpush.msra.mxu0 %v957
    %1884 = vmatpush.msra.mxu0 %v956
    %1885 = vmatpush.msra.mxu0 %v955
    %1886 = vmatpush.msra.mxu0 %v954
    %1887 = vmatpush.msra.mxu0 %v953
    %1888 = vmatpush.msra.mxu0 %v952
    %1889 = vmatpush.msra.mxu0 %v951
    %1890 = vmatpush.msra.mxu0 %v950
    %1891 = vmatmul.f32.gmra.mxu0 %v1847
    %v1892 = vpop.f32.mrf.mxu0
    %v1893 = vadd.f32 %v1870, %v1892
    %1894 = vmatmul.f32.gmra.mxu0 %v1850
    %v1895 = vpop.f32.mrf.mxu0
    %v1896 = vadd.f32 %v1873, %v1895
    %1897 = vdwg.mxu0
    %v1899 = vrot.slane %v1893, 1
    %v1901 = vmax.f32 %v1893, %v1899
    %v1902 = vrot.slane %v1893, 2
    %v1904 = vmax.f32 %v1901, %v1902
    %v1905 = vsub.f32 %v1893, %v1904
    %v1906 = vmul.f32 %v1905, 1.442695
    %v1907 = vpow.pop %v1906
    %v1909 = vrot.slane %v1904, 7
    %v1911 = vsub.f32 %v1893, %v1909
    %v1912 = vmul.f32 %v1911, 1.442695
    %v1913 = vpow.pop %v1912
    %v1914 = vrot.slane %v1904, 6
    %v1916 = vsub.f32 %v1893, %v1914
    %v1917 = vmul.f32 %v1916, 1.442695
    %v1918 = vpow.pop %v1917
    %v1920 = vrot.slane %v1913, 1
    %v1922 = vadd.f32 %v1907, %v1920
    %v1924 = vrot.slane %v1918, 2
    %v1926 = vadd.f32 %v1922, %v1924
    %v1927 = vrcp.pop %v1926
    %v1928 = vmul.f32 %v1907, %v1927
    %v1930 = vrot.slane %v1927, 7
    %v1932 = vmul.f32 %v1913, %v1930
    %v1933 = vrot.slane %v1927, 6
    %v1935 = vmul.f32 %v1918, %v1933
    %v1937 = vrot.slane %v1928, 5
    %v1939 = vmul.f32 %v1928, %v1937
    %v1940 = vrot.slane %v1928, 4
    %v1942 = vmul.f32 %v1932, %v1940
    %v1943 = vrot.slane %v1928, 3
    %v1945 = vmul.f32 %v1935, %v1943
    %v1947 = vrot.slane %v1896, 2
    %v1949 = vmax.f32 %v1901, %v1947
    %v1950 = vsub.f32 %v1893, %v1949
    %v1951 = vmul.f32 %v1950, 1.442695
    %v1952 = vpow.pop %v1951
    %v1954 = vrot.slane %v1949, 7
    %v1956 = vsub.f32 %v1893, %v1954
    %v1957 = vmul.f32 %v1956, 1.442695
    %v1958 = vpow.pop %v1957
    %v1959 = vrot.slane %v1949, 6
    %v1961 = vsub.f32 %v1896, %v1959
    %v1962 = vmul.f32 %v1961, 1.442695
    %v1963 = vpow.pop %v1962
    %v1965 = vrot.slane %v1958, 1
    %v1967 = vadd.f32 %v1952, %v1965
    %v1969 = vrot.slane %v1963, 2
    %v1971 = vadd.f32 %v1967, %v1969
    %v1972 = vrcp.pop %v1971
    %v1973 = vmul.f32 %v1952, %v1972
    %v1975 = vrot.slane %v1972, 7
    %v1977 = vmul.f32 %v1958, %v1975
    %v1978 = vrot.slane %v1972, 6
    %v1980 = vmul.f32 %v1963, %v1978
    %v1982 = vrot.slane %v1932, 3
    %v1984 = vmul.f32 %v1973, %v1982
    %v1986 = vrot.slane %v1984, 3
    %v1988 = vadd.f32 %v1939, %v1986
    %v1989 = vrot.slane %v1932, 2
    %v1991 = vmul.f32 %v1977, %v1989
    %v1993 = vrot.slane %v1991, 3
    %v1995 = vadd.f32 %v1942, %v1993
    %v1996 = vrot.slane %v1932, 1
    %v1998 = vmul.f32 %v1980, %v1996
    %v2000 = vrot.slane %v1998, 3
    %v2002 = vadd.f32 %v1945, %v2000
    %v2003 = vrot.slane %v1896, 1
    %v2005 = vmax.f32 %v1896, %v2003
    %v2006 = vmax.f32 %v2005, %v1947
    %v2007 = vsub.f32 %v1896, %v2006
    %v2008 = vmul.f32 %v2007, 1.442695
    %v2009 = vpow.pop %v2008
    %v2011 = vrot.slane %v2006, 7
    %v2013 = vsub.f32 %v1896, %v2011
    %v2014 = vmul.f32 %v2013, 1.442695
    %v2015 = vpow.pop %v2014
    %v2016 = vrot.slane %v2006, 6
    %v2018 = vsub.f32 %v1896, %v2016
    %v2019 = vmul.f32 %v2018, 1.442695
    %v2020 = vpow.pop %v2019
    %v2022 = vrot.slane %v2015, 1
    %v2024 = vadd.f32 %v2009, %v2022
    %v2026 = vrot.slane %v2020, 2
    %v2028 = vadd.f32 %v2024, %v2026
    %v2029 = vrcp.pop %v2028
    %v2030 = vmul.f32 %v2009, %v2029
    %v2032 = vrot.slane %v2029, 7
    %v2034 = vmul.f32 %v2015, %v2032
    %v2035 = vrot.slane %v2029, 6
    %v2037 = vmul.f32 %v2020, %v2035
    %v2039 = vrot.slane %v1935, 1
    %v2041 = vmul.f32 %v2030, %v2039
    %v2043 = vrot.slane %v2041, 6
    %v2045 = vadd.f32 %v1988, %v2043
    %v2046 = vmul.f32 %v2034, %v1935
    %v2048 = vrot.slane %v2046, 6
    %v2050 = vadd.f32 %v1995, %v2048
    %v2051 = vrot.slane %v1935, 7
    %v2053 = vmul.f32 %v2037, %v2051
    %v2055 = vrot.slane %v2053, 6
    %v2057 = vadd.f32 %v2002, %v2055
    %v2059 = vrot.slane %v2045, 3
    %v2062 = vrot.slane %v2050, 3
    %v2065 = vrot.slane %v2057, 3
    %vm2067 = vcmask 1040384
    %v2068 = vsel %vm2067, %v2059, %v2062
    %vm2069 = vcmask 1041408
    %v2070 = vsel %vm2069, %v2068, %v2065
    %2071 = vst [vmem:[#allocation2] sm:$0x7] %v2070
    // Predicated region
    $region38: #{tpu_custom_call.1} parent=1 // pred_check
      _
    $region39: #{tpu_custom_call.1} parent=1 // pred_check_branch
      %2073 = sbr.rel (0) target = $region41
    $region40: #{tpu_custom_call.1} parent=1 // pred_region
      %2075 = vsyncadd [#allocation3], 0
      %s2077 = sshll.u32 [#allocation2], 4
      %s2078 = int_to_ptr.vmem [resolvable:$true] %s2077
      %s2079 = sshll.u32 %s9, 4
      %s2080 = int_to_ptr.hbm [resolvable:$true] %s2079
      %2082 = dma.vmem_to_hbm [thread:$0]  %s2078, 64, %s2080, [#allocation3]
    $region41: #{tpu_custom_call.1} parent=1 // pred_fallthru
      _
    // Predicated region
    $region42: #{tpu_custom_call.1} parent=1 // pred_check
      _
    $region43: #{tpu_custom_call.1} parent=1 // pred_check_branch
      %2084 = sbr.rel (0) target = $region45
    $region44: #{tpu_custom_call.1} parent=1 // pred_region
      %2086 = dma.done [#allocation3], 64
    $region45: #{tpu_custom_call.1} parent=1 // pred_fallthru
      _
    %2087 = vsyncpa [#allocation3], 1

</llo_original>
